<compile_context>
chip_gen: v5e
topology: v5e:2x2
jax: 0.10.0
libtpu: 0.0.40
codegen_flags: <defaults>
</compile_context>

<pallas_src>
import functools

import jax
import jax.numpy as jnp
from jax.experimental import pallas as pl
from jax.experimental.pallas import tpu as pltpu

LANE = 128  # TPU lane width; merged head output is padded to this for lane-dense stores.


# ----------------------------- Pallas kernel --------------------------------


def _combined_gnn_kernel(a_ref, x_ref, w1_ref, b1_ref, w2_ref, b2_ref, out_ref,
                         *, output_dim, num_classes):
    a = a_ref[...]          # (M, M)   packed block-diagonal normalized adjacency (bf16)
    x = x_ref[...]          # (M, Fin) packed node features (bf16)

    # ---- GCN layer 1:  A_hat @ (X @ W1) + b1  (bf16 MXU, f32 accumulation) ----
    xw = jnp.dot(x, w1_ref[...], preferred_element_type=jnp.float32)
    h = jnp.dot(a, xw.astype(a.dtype), preferred_element_type=jnp.float32) + b1_ref[...]

    # ---- leaky_relu(negative_slope=0.2) in f32 ----
    h = jnp.where(h > 0, h, 0.2 * h)

    # ---- GCN layer 2, reassociated: one A @ h, then the merged head weights ----
    ah = jnp.dot(a, h.astype(a.dtype), preferred_element_type=jnp.float32)
    w2 = w2_ref[...]
    out = jnp.dot(ah.astype(w2.dtype), w2, preferred_element_type=jnp.float32) + b2_ref[...]

    # ---- masked, numerically-stable log_softmax on the class lanes only ----
    lane = jax.lax.broadcasted_iota(jnp.int32, out.shape, 1)
    is_cls = (lane >= output_dim) & (lane < output_dim + num_classes)
    z = jnp.where(is_cls, out, jnp.float32(-1e30))
    mx = jnp.max(z, axis=1, keepdims=True)
    s = z - mx
    e = jnp.where(is_cls, jnp.exp(s), 0.0)
    lse = jnp.log(jnp.sum(e, axis=1, keepdims=True))
    logp = s - lse

    # Single lane-dense, unmasked store: dx lanes untouched, class lanes = log-probs.
    out_ref[...] = jnp.where(is_cls, logp, out)


# ------------------------------- wrapper -------------------------------------


def combined_gnn_forward(a_hat, x, w1, b1, w2, b2, *, output_dim=3,
                         graphs_per_step=None):
    """a_hat: (B,N,N), x: (B,N,Fin); weights shared across the batch."""
    batch, n, f_in = x.shape
    hidden = w1.shape[1]
    total_out = w2.shape[1]
    num_classes = total_out - output_dim
    assert total_out <= LANE

    # Pack G graphs per grid step so the MXU M dimension is filled (G*N >= 256).
    if graphs_per_step is None:
        graphs_per_step = max(1, min(batch, -(-256 // n)))
    g = graphs_per_step
    num_steps = -(-batch // g)
    pad_b = num_steps * g - batch
    if pad_b:
        a_hat = jnp.concatenate(
            [a_hat, jnp.zeros((pad_b, n, n), a_hat.dtype)], axis=0)
        x = jnp.concatenate(
            [x, jnp.zeros((pad_b, n, f_in), x.dtype)], axis=0)
    m = g * n

    # Block-diagonal packed adjacency: (num_steps, M, M).
    a_r = a_hat.reshape(num_steps, g, n, n)
    eye_g = jnp.eye(g, dtype=a_hat.dtype)
    a_blk = jnp.einsum('sgab,gh->sgahb', a_r, eye_g).reshape(num_steps, m, m)
    x_packed = x.reshape(num_steps, m, f_in)

    # Merge the two heads into one lane-padded W2/b2 (dx lanes 0:3, classes 3:13),
    # so the kernel does one matmul and one unmasked lane-dense store.
    w2_p = jnp.pad(w2, ((0, 0), (0, LANE - total_out)))
    b2_p = jnp.pad(b2, ((0, 0), (0, LANE - total_out)))

    # bf16 operands for the MXU; biases, accumulation and epilogue stay f32.
    a_blk = a_blk.astype(jnp.bfloat16)
    x_packed = x_packed.astype(jnp.bfloat16)
    w1_b = w1.astype(jnp.bfloat16)
    w2_b = w2_p.astype(jnp.bfloat16)
    b1_f = b1.astype(jnp.float32)
    b2_f = b2_p.astype(jnp.float32)

    kernel = functools.partial(_combined_gnn_kernel,
                               output_dim=output_dim, num_classes=num_classes)

    out_p = pl.pallas_call(
        kernel,
        out_shape=jax.ShapeDtypeStruct((num_steps, m, LANE), jnp.float32),
        grid=(num_steps,),
        in_specs=[
            pl.BlockSpec((None, m, m), lambda s: (s, 0, 0)),      # packed A_hat
            pl.BlockSpec((None, m, f_in), lambda s: (s, 0, 0)),   # packed X
            pl.BlockSpec((f_in, hidden), lambda s: (0, 0)),       # W1  (resident)
            pl.BlockSpec((1, hidden), lambda s: (0, 0)),          # b1  (resident)
            pl.BlockSpec((hidden, LANE), lambda s: (0, 0)),       # W2 merged (resident)
            pl.BlockSpec((1, LANE), lambda s: (0, 0)),            # b2 merged (resident)
        ],
        out_specs=pl.BlockSpec((None, m, LANE), lambda s: (s, 0, 0)),
        compiler_params=pltpu.CompilerParams(
            dimension_semantics=("parallel",)),   # feeds both TCs on v7x
    )(a_blk, x_packed, w1_b, b1_f, w2_b, b2_f)

    out = out_p.reshape(num_steps * g, n, LANE)[:batch]
    dx = out[:, :, :output_dim]
    class_log_probs = out[:, :, output_dim:output_dim + num_classes]
    return dx, class_log_probs


# ------------------------------- JAX glue ------------------------------------


def build_normalized_adjacency(edge_index, num_nodes):
    """Dense D^-1/2 (A + remaining self loops) D^-1/2, matching PyG gcn_norm."""
    src = edge_index[0]
    dst = edge_index[1]
    a = jnp.zeros((num_nodes, num_nodes), jnp.float32)
    # scatter-ADD so duplicate edges accumulate (parity with PyG's message sum).
    a = a.at[dst, src].add(1.0)
    # add_remaining_self_loops: only add a self loop where none already exists.
    diag = jnp.diagonal(a)
    a = a + jnp.diag(jnp.where(diag == 0, 1.0, 0.0))
    deg = jnp.sum(a, axis=1)
    d_inv_sqrt = jnp.where(deg > 0, 1.0 / jnp.sqrt(deg), 0.0)
    return a * d_inv_sqrt[:, None] * d_inv_sqrt[None, :]


def glorot(key, shape):
    fan_in, fan_out = shape
    limit = jnp.sqrt(6.0 / (fan_in + fan_out))
    return jax.random.uniform(key, shape, jnp.float32, -limit, limit)


def init_params(key, input_features, hidden_features, output_dim, num_classes):
    total_out = output_dim + num_classes
    k1, k2 = jax.random.split(key)
    w1 = glorot(k1, (input_features, hidden_features))
    b1 = jnp.zeros((1, hidden_features), jnp.float32)      # PyG GCN bias init = zeros
    w2 = glorot(k2, (hidden_features, total_out))
    b2 = jnp.zeros((1, total_out), jnp.float32)
    return w1, b1, w2, b2


# -------------------------------- main ---------------------------------------

if __name__ == "__main__":
    B = 64                 # graphs per call (packed 16-per-step -> grid=(4,))
    N = 16                 # nodes per graph
    E = 40                 # directed edges per graph
    INPUT_FEATURES = 32
    HIDDEN_FEATURES = 16
    OUTPUT_DIM = 3
    NUM_CLASSES = 10

    key = jax.random.PRNGKey(0)
    kx, ke_src, ke_dst, kp = jax.random.split(key, 4)

    x = jax.random.normal(kx, (B, N, INPUT_FEATURES), jnp.float32)
    edge_index = jnp.stack([
        jax.random.randint(ke_src, (B, E), 0, N),
        jax.random.randint(ke_dst, (B, E), 0, N),
    ], axis=1)  # (B, 2, E) int32

    w1, b1, w2, b2 = init_params(kp, INPUT_FEATURES, HIDDEN_FEATURES,
                                 OUTPUT_DIM, NUM_CLASSES)

    a_hat = jax.vmap(lambda ei: build_normalized_adjacency(ei, N))(edge_index)

    fwd = jax.jit(functools.partial(combined_gnn_forward, output_dim=OUTPUT_DIM))
    dx, class_log_probs = fwd(a_hat, x, w1, b1, w2, b2)
    jax.block_until_ready((dx, class_log_probs))

    assert dx.shape == (B, N, OUTPUT_DIM)
    assert class_log_probs.shape == (B, N, NUM_CLASSES)
    print("KERNEL_OK")
</pallas_src>

<mosaic_0001>
module attributes {stable_mosaic.version = 11 : i64} {
  func.func @_combined_gnn_kernel(%arg0: i32, %arg1: memref<1x256x256xbf16, #tpu.memory_space<vmem>>, %arg2: memref<1x256x32xbf16, #tpu.memory_space<vmem>>, %arg3: memref<32x16xbf16, #tpu.memory_space<vmem>>, %arg4: memref<1x16xf32, #tpu.memory_space<vmem>>, %arg5: memref<16x128xbf16, #tpu.memory_space<vmem>>, %arg6: memref<1x128xf32, #tpu.memory_space<vmem>>, %arg7: memref<1x256x128xf32, #tpu.memory_space<vmem>>) attributes {dimension_semantics = [#tpu.dimension_semantics<parallel>], iteration_bounds = array<i64: 4>, scalar_prefetch = 0 : i64, scratch_operands = 0 : i64, tpu.core_type = #tpu.core_type<tc>, window_params = [{transform_indices = @transform_0, window_bounds = array<i64: 1, 256, 256>}, {transform_indices = @transform_1, window_bounds = array<i64: 1, 256, 32>}, {pipeline_mode = #tpu.pipeline_mode<synchronous>, transform_indices = @transform_2, window_bounds = array<i64: 32, 16>}, {pipeline_mode = #tpu.pipeline_mode<synchronous>, transform_indices = @transform_3, window_bounds = array<i64: 1, 16>}, {pipeline_mode = #tpu.pipeline_mode<synchronous>, transform_indices = @transform_4, window_bounds = array<i64: 16, 128>}, {pipeline_mode = #tpu.pipeline_mode<synchronous>, transform_indices = @transform_5, window_bounds = array<i64: 1, 128>}, {transform_indices = @transform_6, window_bounds = array<i64: 1, 256, 128>}]} {
    %c0 = arith.constant 0 : index
    %c0_0 = arith.constant 0 : index
    %c0_1 = arith.constant 0 : index
    %0 = vector.load %arg1[%c0, %c0_0, %c0_1] : memref<1x256x256xbf16, #tpu.memory_space<vmem>>, vector<1x256x256xbf16>
    %1 = vector.shape_cast %0 : vector<1x256x256xbf16> to vector<256x256xbf16>
    %c0_2 = arith.constant 0 : index
    %c0_3 = arith.constant 0 : index
    %c0_4 = arith.constant 0 : index
    %2 = vector.load %arg2[%c0_2, %c0_3, %c0_4] : memref<1x256x32xbf16, #tpu.memory_space<vmem>>, vector<1x256x32xbf16>
    %3 = vector.shape_cast %2 : vector<1x256x32xbf16> to vector<256x32xbf16>
    %c0_5 = arith.constant 0 : index
    %c0_6 = arith.constant 0 : index
    %4 = vector.load %arg3[%c0_5, %c0_6] : memref<32x16xbf16, #tpu.memory_space<vmem>>, vector<32x16xbf16>
    %cst = arith.constant dense<0.000000e+00> : vector<256x16xf32>
    %5 = tpu.matmul %3, %4, %cst {dimension_numbers = #tpu.dot_dimension_numbers<[1], [0], [0], [1], [0, 0, 1, 1], [], []>} : vector<256x32xbf16>, vector<32x16xbf16>, vector<256x16xf32> -> vector<256x16xf32>
    %6 = arith.truncf %5 : vector<256x16xf32> to vector<256x16xbf16>
    %cst_7 = arith.constant dense<0.000000e+00> : vector<256x16xf32>
    %7 = tpu.matmul %1, %6, %cst_7 {dimension_numbers = #tpu.dot_dimension_numbers<[1], [0], [0], [1], [0, 0, 1, 1], [], []>} : vector<256x256xbf16>, vector<256x16xbf16>, vector<256x16xf32> -> vector<256x16xf32>
    %c0_8 = arith.constant 0 : index
    %c0_9 = arith.constant 0 : index
    %8 = vector.load %arg4[%c0_8, %c0_9] : memref<1x16xf32, #tpu.memory_space<vmem>>, vector<1x16xf32>
    %9 = vector.broadcast %8 : vector<1x16xf32> to vector<256x16xf32>
    %10 = arith.addf %7, %9 : vector<256x16xf32>
    %cst_10 = arith.constant 0.000000e+00 : f32
    %11 = vector.broadcast %cst_10 : f32 to vector<256x16xf32>
    %12 = arith.cmpf ogt, %10, %11 : vector<256x16xf32>
    %cst_11 = arith.constant 2.000000e-01 : f32
    %13 = vector.broadcast %cst_11 : f32 to vector<256x16xf32>
    %14 = arith.mulf %13, %10 : vector<256x16xf32>
    %15 = arith.select %12, %10, %14 : vector<256x16xi1>, vector<256x16xf32>
    %16 = arith.truncf %15 : vector<256x16xf32> to vector<256x16xbf16>
    %cst_12 = arith.constant dense<0.000000e+00> : vector<256x16xf32>
    %17 = tpu.matmul %1, %16, %cst_12 {dimension_numbers = #tpu.dot_dimension_numbers<[1], [0], [0], [1], [0, 0, 1, 1], [], []>} : vector<256x256xbf16>, vector<256x16xbf16>, vector<256x16xf32> -> vector<256x16xf32>
    %c0_13 = arith.constant 0 : index
    %c0_14 = arith.constant 0 : index
    %18 = vector.load %arg5[%c0_13, %c0_14] : memref<16x128xbf16, #tpu.memory_space<vmem>>, vector<16x128xbf16>
    %19 = arith.truncf %17 : vector<256x16xf32> to vector<256x16xbf16>
    %cst_15 = arith.constant dense<0.000000e+00> : vector<256x128xf32>
    %20 = tpu.matmul %19, %18, %cst_15 {dimension_numbers = #tpu.dot_dimension_numbers<[1], [0], [0], [1], [0, 0, 1, 1], [], []>} : vector<256x16xbf16>, vector<16x128xbf16>, vector<256x128xf32> -> vector<256x128xf32>
    %c0_16 = arith.constant 0 : index
    %c0_17 = arith.constant 0 : index
    %21 = vector.load %arg6[%c0_16, %c0_17] : memref<1x128xf32, #tpu.memory_space<vmem>>, vector<1x128xf32>
    %22 = vector.broadcast %21 : vector<1x128xf32> to vector<256x128xf32>
    %23 = arith.addf %20, %22 : vector<256x128xf32>
    %24 = tpu.iota {dimensions = array<i32: 1>} : vector<256x128xi32>
    %c3_i32 = arith.constant 3 : i32
    %25 = vector.broadcast %c3_i32 : i32 to vector<256x128xi32>
    %26 = arith.cmpi sge, %24, %25 : vector<256x128xi32>
    %c13_i32 = arith.constant 13 : i32
    %27 = vector.broadcast %c13_i32 : i32 to vector<256x128xi32>
    %28 = arith.cmpi slt, %24, %27 : vector<256x128xi32>
    %29 = arith.andi %26, %28 : vector<256x128xi1>
    %cst_18 = arith.constant -1.000000e+30 : f32
    %30 = vector.broadcast %cst_18 : f32 to vector<256x128xf32>
    %31 = arith.select %29, %23, %30 : vector<256x128xi1>, vector<256x128xf32>
    %cst_19 = arith.constant dense<0xFF800000> : vector<256xf32>
    %32 = vector.multi_reduction <maximumf>, %31, %cst_19 [1] : vector<256x128xf32> to vector<256xf32>
    %33 = vector.shape_cast %32 : vector<256xf32> to vector<256x1xf32>
    %34 = vector.broadcast %33 : vector<256x1xf32> to vector<256x128xf32>
    %35 = arith.subf %31, %34 : vector<256x128xf32>
    %36 = math.exp %35 : vector<256x128xf32>
    %cst_20 = arith.constant 0.000000e+00 : f32
    %37 = vector.broadcast %cst_20 : f32 to vector<256x128xf32>
    %38 = arith.select %29, %36, %37 : vector<256x128xi1>, vector<256x128xf32>
    %cst_21 = arith.constant dense<0.000000e+00> : vector<256xf32>
    %39 = vector.multi_reduction <add>, %38, %cst_21 [1] : vector<256x128xf32> to vector<256xf32>
    %40 = vector.shape_cast %39 : vector<256xf32> to vector<256x1xf32>
    %41 = math.log %40 : vector<256x1xf32>
    %42 = vector.broadcast %41 : vector<256x1xf32> to vector<256x128xf32>
    %43 = arith.subf %35, %42 : vector<256x128xf32>
    %44 = arith.select %29, %43, %23 : vector<256x128xi1>, vector<256x128xf32>
    %c0_22 = arith.constant 0 : index
    %c0_23 = arith.constant 0 : index
    %c0_24 = arith.constant 0 : index
    %45 = vector.load %arg7[%c0_22, %c0_23, %c0_24] : memref<1x256x128xf32, #tpu.memory_space<vmem>>, vector<1x256x128xf32>
    %46 = vector.shape_cast %45 : vector<1x256x128xf32> to vector<256x128xf32>
    %47 = vector.shape_cast %44 : vector<256x128xf32> to vector<1x256x128xf32>
    tpu.vector_store %arg7[%c0_22, %c0_23, %c0_24], %47 {strides = array<i32>} : memref<1x256x128xf32, #tpu.memory_space<vmem>>, vector<1x256x128xf32>,
    return
  }
  func.func @transform_0(%arg0: i32) -> (i32, i32, i32) {
    %c0_i32 = arith.constant 0 : i32
    %c0_i32_0 = arith.constant 0 : i32
    %c0_i32_1 = arith.constant 0 : i32
    return %arg0, %c0_i32, %c0_i32_0 : i32, i32, i32
  }
  func.func @transform_1(%arg0: i32) -> (i32, i32, i32) {
    %c0_i32 = arith.constant 0 : i32
    %c0_i32_0 = arith.constant 0 : i32
    %c0_i32_1 = arith.constant 0 : i32
    return %arg0, %c0_i32, %c0_i32_0 : i32, i32, i32
  }
  func.func @transform_2(%arg0: i32) -> (i32, i32) {
    %c0_i32 = arith.constant 0 : i32
    %c0_i32_0 = arith.constant 0 : i32
    %c0_i32_1 = arith.constant 0 : i32
    return %c0_i32, %c0_i32_0 : i32, i32
  }
  func.func @transform_3(%arg0: i32) -> (i32, i32) {
    %c0_i32 = arith.constant 0 : i32
    %c0_i32_0 = arith.constant 0 : i32
    %c0_i32_1 = arith.constant 0 : i32
    return %c0_i32, %c0_i32_0 : i32, i32
  }
  func.func @transform_4(%arg0: i32) -> (i32, i32) {
    %c0_i32 = arith.constant 0 : i32
    %c0_i32_0 = arith.constant 0 : i32
    %c0_i32_1 = arith.constant 0 : i32
    return %c0_i32, %c0_i32_0 : i32, i32
  }
  func.func @transform_5(%arg0: i32) -> (i32, i32) {
    %c0_i32 = arith.constant 0 : i32
    %c0_i32_0 = arith.constant 0 : i32
    %c0_i32_1 = arith.constant 0 : i32
    return %c0_i32, %c0_i32_0 : i32, i32
  }
  func.func @transform_6(%arg0: i32) -> (i32, i32, i32) {
    %c0_i32 = arith.constant 0 : i32
    %c0_i32_0 = arith.constant 0 : i32
    %c0_i32_1 = arith.constant 0 : i32
    return %arg0, %c0_i32, %c0_i32_0 : i32, i32, i32
  }
}

</mosaic_0001>

<llo_original>
// kernel: combined_gnn_forward.1
$region0: #{combined_gnn_forward.1}
  #allocation0 [shape = 'u32[]', space=smem, size = 0x4, offset = 0x4, fixed_abs, tag = 'smem constant byte address 0x4 - core index']
  #allocation1 [shape = 'u32[72,128]{1,0:T(1,128)}', space=vmem, size = 0x9000, scoped, tag = 'internal scratch']
  %s0 = inlined_call_operand.vmem [shape: bf16[4,256,256], index: 0, kind: input, shape index: {}]
  %s1 = inlined_call_operand.vmem [shape: bf16[4,256,32], index: 1, kind: input, shape index: {}]
  %s2 = inlined_call_operand.vmem [shape: bf16[32,16], index: 2, kind: input, shape index: {}]
  %s3 = inlined_call_operand.vmem [shape: f32[1,16], index: 3, kind: input, shape index: {}]
  %s4 = inlined_call_operand.vmem [shape: bf16[16,128], index: 4, kind: input, shape index: {}]
  %s5 = inlined_call_operand.vmem [shape: f32[1,128], index: 5, kind: input, shape index: {}]
  %s6 = inlined_call_operand.vmem [shape: f32[4,256,128], index: 6, kind: output, shape index: {}]
  %s7 = sld [smem:[#allocation0]]
  $region57: #{combined_gnn_forward.1} parent=0
    _
  %s9 = ssub.s32 1, %s7
  %s10 = scalar_select 0, %s9, %s7
  loop: start=0, step=1, limit=6
  $region2: #{combined_gnn_forward.1} parent=0 // loop_pre_header
    _
  $region3: #{combined_gnn_forward.1} parent=0 // loop_header
    %s12 = sphi 0, %s16
    %p13 = scmp.ge.s32.totalorder %s12, 6
    %s22 = sphi 0, %s24
    %s25 = sphi 0, %s22
    %s26 = sphi 0, %s25
    %s42 = sphi 0, %s26
    %s48 = sphi 0, %s50
    %s51 = sphi 0, %s48
    %s52 = sphi 0, %s51
    %s68 = sphi 0, %s52
    %s72 = sphi 0, %s72
    %s74 = sphi 0, %s72
    %s75 = sphi 0, %s74
    %s89 = sphi 0, %s75
    %s93 = sphi 0, %s93
    %s95 = sphi 0, %s93
    %s96 = sphi 0, %s95
    %s110 = sphi 0, %s96
    %s114 = sphi 0, %s114
    %s116 = sphi 0, %s114
    %s117 = sphi 0, %s116
    %s131 = sphi 0, %s117
    %s135 = sphi 0, %s135
    %s137 = sphi 0, %s135
    %s138 = sphi 0, %s137
    %s152 = sphi 0, %s138
    %s158 = sphi 0, %s160
    %s161 = sphi 0, %s158
    %s162 = sphi 0, %s161
    %s178 = sphi 0, %s162
  $region4: #{combined_gnn_forward.1} parent=0 // loop_header_branch
    %15 = sbr.rel (%p13) target = $region8
  $region5: #{combined_gnn_forward.1} parent=0 // loop_body
    %s17 = ssub.s32 %s12, 1
    %s18 = ssub.s32 %s12, 2
    %s19 = sadd.s32 %s12, 1
    %s20 = ssub.s32 %s12, %s19
    %p21 = scmp.eq.s32.totalorder %s20, 0
    %s23 = sadd.s32 %s22, 1
    %s24 = scalar_select %p21, %s22, %s23
    %p27 = pneg %p21
    %p28 = scmp.eq.s32.totalorder %s12, 3
    %p29 = por %p27, %p28
    %p30 = scmp.ne.s32.totalorder %s22, %s25
    %p31 = scmp.eq.s32.totalorder %s12, 0
    %p32 = por %p30, %p31
    %p33 = scmp.ne.s32.totalorder %s22, %s25
    %p34 = scmp.eq.s32.totalorder %s17, 3
    %p35 = por %p33, %p34
    %p36 = scmp.ne.s32.totalorder %s25, %s26
    %p37 = scmp.eq.s32.totalorder %s17, 0
    %p38 = por %p36, %p37
    %p39 = scmp.ne.s32.totalorder %s25, %s26
    %p40 = scmp.eq.s32.totalorder %s18, 3
    %p41 = por %p39, %p40
    %p43 = scmp.ne.s32.totalorder %s26, %s42
    %p44 = scmp.eq.s32.totalorder %s18, 0
    %p45 = por %p43, %p44
    %s46 = ssub.s32 %s12, %s19
    %p47 = scmp.eq.s32.totalorder %s46, 0
    %s49 = sadd.s32 %s48, 1
    %s50 = scalar_select %p47, %s48, %s49
    %p53 = pneg %p47
    %p54 = scmp.eq.s32.totalorder %s12, 3
    %p55 = por %p53, %p54
    %p56 = scmp.ne.s32.totalorder %s48, %s51
    %p57 = scmp.eq.s32.totalorder %s12, 0
    %p58 = por %p56, %p57
    %p59 = scmp.ne.s32.totalorder %s48, %s51
    %p60 = scmp.eq.s32.totalorder %s17, 3
    %p61 = por %p59, %p60
    %p62 = scmp.ne.s32.totalorder %s51, %s52
    %p63 = scmp.eq.s32.totalorder %s17, 0
    %p64 = por %p62, %p63
    %p65 = scmp.ne.s32.totalorder %s51, %s52
    %p66 = scmp.eq.s32.totalorder %s18, 3
    %p67 = por %p65, %p66
    %p69 = scmp.ne.s32.totalorder %s52, %s68
    %p70 = scmp.eq.s32.totalorder %s18, 0
    %p71 = por %p69, %p70
    %s73 = sadd.s32 %s72, 1
    %p76 = scmp.eq.s32.totalorder %s12, 3
    %p77 = scmp.ne.s32.totalorder %s72, %s74
    %p78 = scmp.eq.s32.totalorder %s12, 0
    %p79 = por %p77, %p78
    %p80 = scmp.ne.s32.totalorder %s72, %s74
    %p81 = scmp.eq.s32.totalorder %s17, 3
    %p82 = por %p80, %p81
    %p83 = scmp.ne.s32.totalorder %s74, %s75
    %p84 = scmp.eq.s32.totalorder %s17, 0
    %p85 = por %p83, %p84
    %p86 = scmp.ne.s32.totalorder %s74, %s75
    %p87 = scmp.eq.s32.totalorder %s18, 3
    %p88 = por %p86, %p87
    %p90 = scmp.ne.s32.totalorder %s75, %s89
    %p91 = scmp.eq.s32.totalorder %s18, 0
    %p92 = por %p90, %p91
    %s94 = sadd.s32 %s93, 1
    %p97 = scmp.eq.s32.totalorder %s12, 3
    %p98 = scmp.ne.s32.totalorder %s93, %s95
    %p99 = scmp.eq.s32.totalorder %s12, 0
    %p100 = por %p98, %p99
    %p101 = scmp.ne.s32.totalorder %s93, %s95
    %p102 = scmp.eq.s32.totalorder %s17, 3
    %p103 = por %p101, %p102
    %p104 = scmp.ne.s32.totalorder %s95, %s96
    %p105 = scmp.eq.s32.totalorder %s17, 0
    %p106 = por %p104, %p105
    %p107 = scmp.ne.s32.totalorder %s95, %s96
    %p108 = scmp.eq.s32.totalorder %s18, 3
    %p109 = por %p107, %p108
    %p111 = scmp.ne.s32.totalorder %s96, %s110
    %p112 = scmp.eq.s32.totalorder %s18, 0
    %p113 = por %p111, %p112
    %s115 = sadd.s32 %s114, 1
    %p118 = scmp.eq.s32.totalorder %s12, 3
    %p119 = scmp.ne.s32.totalorder %s114, %s116
    %p120 = scmp.eq.s32.totalorder %s12, 0
    %p121 = por %p119, %p120
    %p122 = scmp.ne.s32.totalorder %s114, %s116
    %p123 = scmp.eq.s32.totalorder %s17, 3
    %p124 = por %p122, %p123
    %p125 = scmp.ne.s32.totalorder %s116, %s117
    %p126 = scmp.eq.s32.totalorder %s17, 0
    %p127 = por %p125, %p126
    %p128 = scmp.ne.s32.totalorder %s116, %s117
    %p129 = scmp.eq.s32.totalorder %s18, 3
    %p130 = por %p128, %p129
    %p132 = scmp.ne.s32.totalorder %s117, %s131
    %p133 = scmp.eq.s32.totalorder %s18, 0
    %p134 = por %p132, %p133
    %s136 = sadd.s32 %s135, 1
    %p139 = scmp.eq.s32.totalorder %s12, 3
    %p140 = scmp.ne.s32.totalorder %s135, %s137
    %p141 = scmp.eq.s32.totalorder %s12, 0
    %p142 = por %p140, %p141
    %p143 = scmp.ne.s32.totalorder %s135, %s137
    %p144 = scmp.eq.s32.totalorder %s17, 3
    %p145 = por %p143, %p144
    %p146 = scmp.ne.s32.totalorder %s137, %s138
    %p147 = scmp.eq.s32.totalorder %s17, 0
    %p148 = por %p146, %p147
    %p149 = scmp.ne.s32.totalorder %s137, %s138
    %p150 = scmp.eq.s32.totalorder %s18, 3
    %p151 = por %p149, %p150
    %p153 = scmp.ne.s32.totalorder %s138, %s152
    %p154 = scmp.eq.s32.totalorder %s18, 0
    %p155 = por %p153, %p154
    %s156 = ssub.s32 %s12, %s19
    %p157 = scmp.eq.s32.totalorder %s156, 0
    %s159 = sadd.s32 %s158, 1
    %s160 = scalar_select %p157, %s158, %s159
    %p163 = pneg %p157
    %p164 = scmp.eq.s32.totalorder %s12, 3
    %p165 = por %p163, %p164
    %p166 = scmp.ne.s32.totalorder %s158, %s161
    %p167 = scmp.eq.s32.totalorder %s12, 0
    %p168 = por %p166, %p167
    %p169 = scmp.ne.s32.totalorder %s158, %s161
    %p170 = scmp.eq.s32.totalorder %s17, 3
    %p171 = por %p169, %p170
    %p172 = scmp.ne.s32.totalorder %s161, %s162
    %p173 = scmp.eq.s32.totalorder %s17, 0
    %p174 = por %p172, %p173
    %p175 = scmp.ne.s32.totalorder %s161, %s162
    %p176 = scmp.eq.s32.totalorder %s18, 3
    %p177 = por %p175, %p176
    %p179 = scmp.ne.s32.totalorder %s162, %s178
    %p180 = scmp.eq.s32.totalorder %s18, 0
    %p181 = por %p179, %p180
    %p182 = scmp.le.s32.totalorder 1, %s12
    %p183 = scmp.lt.s32.totalorder %s12, 5
    %p184 = pnand %p182, %p183
    %p185 = pneg %p184
    // Predicated region
    $region9: #{combined_gnn_forward.1} parent=5 // pred_check
      _
    $region10: #{combined_gnn_forward.1} parent=5 // pred_check_branch
      %187 = sbr.rel (%p184) target = $region12
    $region11: #{combined_gnn_forward.1} parent=5 // pred_region
      %s188 = ssub.s32 %s12, 1
      // Predicated region
      $region13: #{combined_gnn_forward.1} parent=11 // pred_check
        %p189 = pneg %p85
      $region14: #{combined_gnn_forward.1} parent=11 // pred_check_branch
        %191 = sbr.rel (%p189) target = $region16
      $region15: #{combined_gnn_forward.1} parent=11 // pred_region
        _
      $region16: #{combined_gnn_forward.1} parent=11 // pred_fallthru
        _
      // Predicated region
      $region17: #{combined_gnn_forward.1} parent=11 // pred_check
        %p192 = pneg %p106
      $region18: #{combined_gnn_forward.1} parent=11 // pred_check_branch
        %194 = sbr.rel (%p192) target = $region20
      $region19: #{combined_gnn_forward.1} parent=11 // pred_region
        _
      $region20: #{combined_gnn_forward.1} parent=11 // pred_fallthru
        _
      // Predicated region
      $region21: #{combined_gnn_forward.1} parent=11 // pred_check
        %p195 = pneg %p127
      $region22: #{combined_gnn_forward.1} parent=11 // pred_check_branch
        %197 = sbr.rel (%p195) target = $region24
      $region23: #{combined_gnn_forward.1} parent=11 // pred_region
        _
      $region24: #{combined_gnn_forward.1} parent=11 // pred_fallthru
        _
      // Predicated region
      $region25: #{combined_gnn_forward.1} parent=11 // pred_check
        %p198 = pneg %p148
      $region26: #{combined_gnn_forward.1} parent=11 // pred_check_branch
        %200 = sbr.rel (%p198) target = $region28
      $region27: #{combined_gnn_forward.1} parent=11 // pred_region
        _
      $region28: #{combined_gnn_forward.1} parent=11 // pred_fallthru
        _
    $region12: #{combined_gnn_forward.1} parent=5 // pred_fallthru
      _
    %p201 = scmp.lt.s32.totalorder %s12, 4
    // Predicated region
    $region29: #{combined_gnn_forward.1} parent=5 // pred_check
      %p202 = pneg %p201
    $region30: #{combined_gnn_forward.1} parent=5 // pred_check_branch
      %204 = sbr.rel (%p202) target = $region32
    $region31: #{combined_gnn_forward.1} parent=5 // pred_region
      // Predicated region
      $region33: #{combined_gnn_forward.1} parent=31 // pred_check
        %p205 = pneg %p32
      $region34: #{combined_gnn_forward.1} parent=31 // pred_check_branch
        %207 = sbr.rel (%p205) target = $region36
      $region35: #{combined_gnn_forward.1} parent=31 // pred_region
        %p208 = scmp.lt.s32.totalorder %s12, 3
        %s209 = scalar_select %p208, %s12, 3
        %s210 = smul.addr %s209, 64
        %s211 = smul.addr %s210, 4
        %s212 = scalar_lea.vmem %s0, %s211
      $region36: #{combined_gnn_forward.1} parent=31 // pred_fallthru
        _
      // Predicated region
      $region37: #{combined_gnn_forward.1} parent=31 // pred_check
        %p213 = pneg %p58
      $region38: #{combined_gnn_forward.1} parent=31 // pred_check_branch
        %215 = sbr.rel (%p213) target = $region40
      $region39: #{combined_gnn_forward.1} parent=31 // pred_region
        %p216 = scmp.lt.s32.totalorder %s12, 3
        %s217 = scalar_select %p216, %s12, 3
        %s218 = smul.addr %s217, 32
        %s219 = smul.addr %s218, 4
        %s220 = scalar_lea.vmem %s1, %s219
      $region40: #{combined_gnn_forward.1} parent=31 // pred_fallthru
        _
    $region32: #{combined_gnn_forward.1} parent=5 // pred_fallthru
      _
    %p221 = scmp.le.s32.totalorder 1, %s12
    %p222 = scmp.lt.s32.totalorder %s12, 5
    %p223 = pnand %p221, %p222
    %p224 = pneg %p223
    // Predicated region
    $region41: #{combined_gnn_forward.1} parent=5 // pred_check
      _
    $region42: #{combined_gnn_forward.1} parent=5 // pred_check_branch
      %226 = sbr.rel (%p223) target = $region44
    $region43: #{combined_gnn_forward.1} parent=5 // pred_region
      %s227 = ssub.s32 %s12, 1
      %p228 = scmp.lt.s32.totalorder %s17, 3
      %s229 = scalar_select %p228, %s17, 3
      %s230 = smul.addr %s229, 64
      %s231 = smul.addr %s230, 4
      %s232 = scalar_lea.vmem %s0, %s231
      %p233 = pneg %p38
      %p234 = pneg %p35
      %p235 = scmp.lt.s32.totalorder %s17, 3
      %s236 = scalar_select %p235, %s17, 3
      %s237 = smul.addr %s236, 32
      %s238 = smul.addr %s237, 4
      %s239 = scalar_lea.vmem %s1, %s238
      %p240 = pneg %p64
      %p241 = pneg %p61
      %p242 = pneg %p85
      %p243 = pneg %p82
      %p244 = pneg %p106
      %p245 = pneg %p103
      %p246 = pneg %p127
      %p247 = pneg %p124
      %p248 = pneg %p148
      %p249 = pneg %p145
      %p250 = pneg %p174
      %p251 = pneg %p171
      %p252 = scmp.lt.s32.totalorder %s17, 3
      %s253 = scalar_select %p252, %s17, 3
      %s254 = smul.addr %s253, 32
      %s255 = smul.addr %s254, 8
      %s256 = scalar_lea.vmem %s6, %s255
      %p257 = scmp.lt.s32.totalorder %s17, 3
      %s258 = scalar_select %p257, %s17, 3
      %s259 = smul.addr %s258, 64
      %s260 = smul.addr %s259, 4
      %s261 = scalar_lea.vmem %s0, %s260
      %p262 = scmp.lt.s32.totalorder %s17, 3
      %s263 = scalar_select %p262, %s17, 3
      %s264 = smul.addr %s263, 32
      %s265 = smul.addr %s264, 4
      %s266 = scalar_lea.vmem %s1, %s265
      %p267 = scmp.lt.s32.totalorder %s17, 3
      %s268 = scalar_select %p267, %s17, 3
      %s269 = smul.addr %s268, 32
      %s270 = smul.addr %s269, 8
      %s271 = scalar_lea.vmem %s6, %s270
      %v273 = vld [vmem:[%s261] sm:$0xff]
      %v274 = vld [vmem:[%s261 + $0x8] sm:$0xff]
      %v275 = vld [vmem:[%s261 + $0x10] sm:$0xff]
      %v276 = vld [vmem:[%s261 + $0x18] sm:$0xff]
      %v277 = vld [vmem:[%s261 + $0x20] sm:$0xff]
      %v278 = vld [vmem:[%s261 + $0x28] sm:$0xff]
      %v279 = vld [vmem:[%s261 + $0x30] sm:$0xff]
      %v280 = vld [vmem:[%s261 + $0x38] sm:$0xff]
      %v281 = vld [vmem:[%s261 + $0x40] sm:$0xff]
      %v282 = vld [vmem:[%s261 + $0x48] sm:$0xff]
      %v283 = vld [vmem:[%s261 + $0x50] sm:$0xff]
      %v284 = vld [vmem:[%s261 + $0x58] sm:$0xff]
      %v285 = vld [vmem:[%s261 + $0x60] sm:$0xff]
      %v286 = vld [vmem:[%s261 + $0x68] sm:$0xff]
      %v287 = vld [vmem:[%s261 + $0x70] sm:$0xff]
      %v288 = vld [vmem:[%s261 + $0x78] sm:$0xff]
      %v289 = vld [vmem:[%s261 + $0x80] sm:$0xff]
      %v290 = vld [vmem:[%s261 + $0x88] sm:$0xff]
      %v291 = vld [vmem:[%s261 + $0x90] sm:$0xff]
      %v292 = vld [vmem:[%s261 + $0x98] sm:$0xff]
      %v293 = vld [vmem:[%s261 + $0xa0] sm:$0xff]
      %v294 = vld [vmem:[%s261 + $0xa8] sm:$0xff]
      %v295 = vld [vmem:[%s261 + $0xb0] sm:$0xff]
      %v296 = vld [vmem:[%s261 + $0xb8] sm:$0xff]
      %v297 = vld [vmem:[%s261 + $0xc0] sm:$0xff]
      %v298 = vld [vmem:[%s261 + $0xc8] sm:$0xff]
      %v299 = vld [vmem:[%s261 + $0xd0] sm:$0xff]
      %v300 = vld [vmem:[%s261 + $0xd8] sm:$0xff]
      %v301 = vld [vmem:[%s261 + $0xe0] sm:$0xff]
      %v302 = vld [vmem:[%s261 + $0xe8] sm:$0xff]
      %v303 = vld [vmem:[%s261 + $0xf0] sm:$0xff]
      %v304 = vld [vmem:[%s261 + $0xf8] sm:$0xff]
      %v305 = vld [vmem:[%s266] sm:$0xf]
      %v306 = vld [vmem:[%s266 + $0x4] sm:$0xf]
      %v307 = vld [vmem:[%s266 + $0x8] sm:$0xf]
      %v308 = vld [vmem:[%s266 + $0xc] sm:$0xf]
      %v309 = vld [vmem:[%s266 + $0x10] sm:$0xf]
      %v310 = vld [vmem:[%s266 + $0x14] sm:$0xf]
      %v311 = vld [vmem:[%s266 + $0x18] sm:$0xf]
      %v312 = vld [vmem:[%s266 + $0x1c] sm:$0xf]
      %v313 = vld [vmem:[%s266 + $0x20] sm:$0xf]
      %v314 = vld [vmem:[%s266 + $0x24] sm:$0xf]
      %v315 = vld [vmem:[%s266 + $0x28] sm:$0xf]
      %v316 = vld [vmem:[%s266 + $0x2c] sm:$0xf]
      %v317 = vld [vmem:[%s266 + $0x30] sm:$0xf]
      %v318 = vld [vmem:[%s266 + $0x34] sm:$0xf]
      %v319 = vld [vmem:[%s266 + $0x38] sm:$0xf]
      %v320 = vld [vmem:[%s266 + $0x3c] sm:$0xf]
      %v321 = vld [vmem:[%s266 + $0x40] sm:$0xf]
      %v322 = vld [vmem:[%s266 + $0x44] sm:$0xf]
      %v323 = vld [vmem:[%s266 + $0x48] sm:$0xf]
      %v324 = vld [vmem:[%s266 + $0x4c] sm:$0xf]
      %v325 = vld [vmem:[%s266 + $0x50] sm:$0xf]
      %v326 = vld [vmem:[%s266 + $0x54] sm:$0xf]
      %v327 = vld [vmem:[%s266 + $0x58] sm:$0xf]
      %v328 = vld [vmem:[%s266 + $0x5c] sm:$0xf]
      %v329 = vld [vmem:[%s266 + $0x60] sm:$0xf]
      %v330 = vld [vmem:[%s266 + $0x64] sm:$0xf]
      %v331 = vld [vmem:[%s266 + $0x68] sm:$0xf]
      %v332 = vld [vmem:[%s266 + $0x6c] sm:$0xf]
      %v333 = vld [vmem:[%s266 + $0x70] sm:$0xf]
      %v334 = vld [vmem:[%s266 + $0x74] sm:$0xf]
      %v335 = vld [vmem:[%s266 + $0x78] sm:$0xf]
      %v336 = vld [vmem:[%s266 + $0x7c] sm:$0xf]
      %v337 = vld [vmem:[%s2] sm:$0xf]
      %v338 = vld [vmem:[%s2 + $0x4] sm:$0xf]
      %v339 = vld [vmem:[%s2 + $0x8] sm:$0xf]
      %v340 = vld [vmem:[%s2 + $0xc] sm:$0xf]
      %v373 = vunpack.c.l.b16 %v305
      %v374 = vunpack.c.l.b16 %v306
      %v375 = vunpack.c.l.b16 %v307
      %v376 = vunpack.c.l.b16 %v308
      %v377 = vunpack.c.l.b16 %v309
      %v378 = vunpack.c.l.b16 %v310
      %v379 = vunpack.c.l.b16 %v311
      %v380 = vunpack.c.l.b16 %v312
      %v381 = vunpack.c.l.b16 %v313
      %v382 = vunpack.c.l.b16 %v314
      %v383 = vunpack.c.l.b16 %v315
      %v384 = vunpack.c.l.b16 %v316
      %v385 = vunpack.c.l.b16 %v317
      %v386 = vunpack.c.l.b16 %v318
      %v387 = vunpack.c.l.b16 %v319
      %v388 = vunpack.c.l.b16 %v320
      %v389 = vunpack.c.l.b16 %v321
      %v390 = vunpack.c.l.b16 %v322
      %v391 = vunpack.c.l.b16 %v323
      %v392 = vunpack.c.l.b16 %v324
      %v393 = vunpack.c.l.b16 %v325
      %v394 = vunpack.c.l.b16 %v326
      %v395 = vunpack.c.l.b16 %v327
      %v396 = vunpack.c.l.b16 %v328
      %v397 = vunpack.c.l.b16 %v329
      %v398 = vunpack.c.l.b16 %v330
      %v399 = vunpack.c.l.b16 %v331
      %v400 = vunpack.c.l.b16 %v332
      %v401 = vunpack.c.l.b16 %v333
      %v402 = vunpack.c.l.b16 %v334
      %v403 = vunpack.c.l.b16 %v335
      %v404 = vunpack.c.l.b16 %v336
      %v405 = vpack.c.b16 %v374, %v373
      %v406 = vpack.c.b16 %v376, %v375
      %v407 = vpack.c.b16 %v378, %v377
      %v408 = vpack.c.b16 %v380, %v379
      %v409 = vpack.c.b16 %v382, %v381
      %v410 = vpack.c.b16 %v384, %v383
      %v411 = vpack.c.b16 %v386, %v385
      %v412 = vpack.c.b16 %v388, %v387
      %v413 = vpack.c.b16 %v390, %v389
      %v414 = vpack.c.b16 %v392, %v391
      %v415 = vpack.c.b16 %v394, %v393
      %v416 = vpack.c.b16 %v396, %v395
      %v417 = vpack.c.b16 %v398, %v397
      %v418 = vpack.c.b16 %v400, %v399
      %v419 = vpack.c.b16 %v402, %v401
      %v420 = vpack.c.b16 %v404, %v403
      %v425 = vunpack.c.l.b16 %v337
      %v426 = vunpack.c.l.b16 %v338
      %v427 = vunpack.c.l.b16 %v339
      %v428 = vunpack.c.l.b16 %v340
      %v429 = vpack.c.b16 %v426, %v425
      %v430 = vpack.c.b16 %v428, %v427
      %vm433 = vcmask 261120
      %v435 = vsel %vm433, %v405, 0
      %v438 = vsel %vm433, %v406, 0
      %v441 = vsel %vm433, %v407, 0
      %v444 = vsel %vm433, %v408, 0
      %v447 = vsel %vm433, %v409, 0
      %v450 = vsel %vm433, %v410, 0
      %v453 = vsel %vm433, %v411, 0
      %v456 = vsel %vm433, %v412, 0
      %v459 = vsel %vm433, %v413, 0
      %v462 = vsel %vm433, %v414, 0
      %v465 = vsel %vm433, %v415, 0
      %v468 = vsel %vm433, %v416, 0
      %v471 = vsel %vm433, %v417, 0
      %v474 = vsel %vm433, %v418, 0
      %v477 = vsel %vm433, %v419, 0
      %v480 = vsel %vm433, %v420, 0
      %482 = vmatpush.bf16.msra.mxu0 0
      %483 = vmatpush.bf16.msra.mxu0 0
      %484 = vmatpush.bf16.msra.mxu0 0
      %485 = vmatpush.bf16.msra.mxu0 0
      %486 = vmatpush.bf16.msra.mxu0 0
      %487 = vmatpush.bf16.msra.mxu0 0
      %488 = vmatpush.bf16.msra.mxu0 %v430
      %489 = vmatpush.bf16.msra.mxu0 %v429
      %490 = vmatmul.bf16.gmra.mxu0 %v435
      %v491 = vpop.f32.mrf.mxu0
      %v492 = vadd.f32 0.0, %v491
      %v493 = vpop.f32.mrf.mxu0
      %v494 = vadd.f32 0.0, %v493
      %495 = vmatmul.bf16.gmra.mxu0 %v438
      %v496 = vpop.f32.mrf.mxu0
      %v497 = vadd.f32 0.0, %v496
      %v498 = vpop.f32.mrf.mxu0
      %v499 = vadd.f32 0.0, %v498
      %500 = vmatmul.bf16.gmra.mxu0 %v441
      %v501 = vpop.f32.mrf.mxu0
      %v502 = vadd.f32 0.0, %v501
      %v503 = vpop.f32.mrf.mxu0
      %v504 = vadd.f32 0.0, %v503
      %505 = vmatmul.bf16.gmra.mxu0 %v444
      %v506 = vpop.f32.mrf.mxu0
      %v507 = vadd.f32 0.0, %v506
      %v508 = vpop.f32.mrf.mxu0
      %v509 = vadd.f32 0.0, %v508
      %510 = vmatmul.bf16.gmra.mxu0 %v447
      %v511 = vpop.f32.mrf.mxu0
      %v512 = vadd.f32 0.0, %v511
      %v513 = vpop.f32.mrf.mxu0
      %v514 = vadd.f32 0.0, %v513
      %515 = vmatmul.bf16.gmra.mxu0 %v450
      %v516 = vpop.f32.mrf.mxu0
      %v517 = vadd.f32 0.0, %v516
      %v518 = vpop.f32.mrf.mxu0
      %v519 = vadd.f32 0.0, %v518
      %520 = vmatmul.bf16.gmra.mxu0 %v453
      %v521 = vpop.f32.mrf.mxu0
      %v522 = vadd.f32 0.0, %v521
      %v523 = vpop.f32.mrf.mxu0
      %v524 = vadd.f32 0.0, %v523
      %525 = vmatmul.bf16.gmra.mxu0 %v456
      %v526 = vpop.f32.mrf.mxu0
      %v527 = vadd.f32 0.0, %v526
      %v528 = vpop.f32.mrf.mxu0
      %v529 = vadd.f32 0.0, %v528
      %530 = vmatmul.bf16.gmra.mxu0 %v459
      %v531 = vpop.f32.mrf.mxu0
      %v532 = vadd.f32 0.0, %v531
      %v533 = vpop.f32.mrf.mxu0
      %v534 = vadd.f32 0.0, %v533
      %535 = vmatmul.bf16.gmra.mxu0 %v462
      %v536 = vpop.f32.mrf.mxu0
      %v537 = vadd.f32 0.0, %v536
      %v538 = vpop.f32.mrf.mxu0
      %v539 = vadd.f32 0.0, %v538
      %540 = vmatmul.bf16.gmra.mxu0 %v465
      %v541 = vpop.f32.mrf.mxu0
      %v542 = vadd.f32 0.0, %v541
      %v543 = vpop.f32.mrf.mxu0
      %v544 = vadd.f32 0.0, %v543
      %545 = vmatmul.bf16.gmra.mxu0 %v468
      %v546 = vpop.f32.mrf.mxu0
      %v547 = vadd.f32 0.0, %v546
      %v548 = vpop.f32.mrf.mxu0
      %v549 = vadd.f32 0.0, %v548
      %550 = vmatmul.bf16.gmra.mxu0 %v471
      %v551 = vpop.f32.mrf.mxu0
      %v552 = vadd.f32 0.0, %v551
      %v553 = vpop.f32.mrf.mxu0
      %v554 = vadd.f32 0.0, %v553
      %555 = vmatmul.bf16.gmra.mxu0 %v474
      %v556 = vpop.f32.mrf.mxu0
      %v557 = vadd.f32 0.0, %v556
      %v558 = vpop.f32.mrf.mxu0
      %v559 = vadd.f32 0.0, %v558
      %560 = vmatmul.bf16.gmra.mxu0 %v477
      %v561 = vpop.f32.mrf.mxu0
      %v562 = vadd.f32 0.0, %v561
      %v563 = vpop.f32.mrf.mxu0
      %v564 = vadd.f32 0.0, %v563
      %565 = vmatmul.bf16.gmra.mxu0 %v480
      %v566 = vpop.f32.mrf.mxu0
      %v567 = vadd.f32 0.0, %v566
      %v568 = vpop.f32.mrf.mxu0
      %v569 = vadd.f32 0.0, %v568
      %570 = vdwg.mxu0
      %v571 = vpack.c.bf16 %v494, %v492
      %v572 = vpack.c.bf16 %v499, %v497
      %v573 = vpack.c.bf16 %v504, %v502
      %v574 = vpack.c.bf16 %v509, %v507
      %v575 = vpack.c.bf16 %v514, %v512
      %v576 = vpack.c.bf16 %v519, %v517
      %v577 = vpack.c.bf16 %v524, %v522
      %v578 = vpack.c.bf16 %v529, %v527
      %v579 = vpack.c.bf16 %v534, %v532
      %v580 = vpack.c.bf16 %v539, %v537
      %v581 = vpack.c.bf16 %v544, %v542
      %v582 = vpack.c.bf16 %v549, %v547
      %v583 = vpack.c.bf16 %v554, %v552
      %v584 = vpack.c.bf16 %v559, %v557
      %v585 = vpack.c.bf16 %v564, %v562
      %v586 = vpack.c.bf16 %v569, %v567
      %v587 = vld [vmem:[%s3] sm:$0x1]
      %v589 = vperm.slane %v587, 0
      %v623 = vunpack.c.l.b16 %v273
      %v624 = vunpack.c.h.b16 %v273
      %v625 = vunpack.c.l.b16 %v274
      %v626 = vunpack.c.h.b16 %v274
      %v627 = vunpack.c.l.b16 %v275
      %v628 = vunpack.c.h.b16 %v275
      %v629 = vunpack.c.l.b16 %v276
      %v630 = vunpack.c.h.b16 %v276
      %v631 = vunpack.c.l.b16 %v277
      %v632 = vunpack.c.h.b16 %v277
      %v633 = vunpack.c.l.b16 %v278
      %v634 = vunpack.c.h.b16 %v278
      %v635 = vunpack.c.l.b16 %v279
      %v636 = vunpack.c.h.b16 %v279
      %v637 = vunpack.c.l.b16 %v280
      %v638 = vunpack.c.h.b16 %v280
      %v639 = vunpack.c.l.b16 %v281
      %v640 = vunpack.c.h.b16 %v281
      %v641 = vunpack.c.l.b16 %v282
      %v642 = vunpack.c.h.b16 %v282
      %v643 = vunpack.c.l.b16 %v283
      %v644 = vunpack.c.h.b16 %v283
      %v645 = vunpack.c.l.b16 %v284
      %v646 = vunpack.c.h.b16 %v284
      %v647 = vunpack.c.l.b16 %v285
      %v648 = vunpack.c.h.b16 %v285
      %v649 = vunpack.c.l.b16 %v286
      %v650 = vunpack.c.h.b16 %v286
      %v651 = vunpack.c.l.b16 %v287
      %v652 = vunpack.c.h.b16 %v287
      %v653 = vunpack.c.l.b16 %v288
      %v654 = vunpack.c.h.b16 %v288
      %v655 = vunpack.c.l.b16 %v289
      %v656 = vunpack.c.h.b16 %v289
      %v657 = vunpack.c.l.b16 %v290
      %v658 = vunpack.c.h.b16 %v290
      %v659 = vunpack.c.l.b16 %v291
      %v660 = vunpack.c.h.b16 %v291
      %v661 = vunpack.c.l.b16 %v292
      %v662 = vunpack.c.h.b16 %v292
      %v663 = vunpack.c.l.b16 %v293
      %v664 = vunpack.c.h.b16 %v293
      %v665 = vunpack.c.l.b16 %v294
      %v666 = vunpack.c.h.b16 %v294
      %v667 = vunpack.c.l.b16 %v295
      %v668 = vunpack.c.h.b16 %v295
      %v669 = vunpack.c.l.b16 %v296
      %v670 = vunpack.c.h.b16 %v296
      %v671 = vunpack.c.l.b16 %v297
      %v672 = vunpack.c.h.b16 %v297
      %v673 = vunpack.c.l.b16 %v298
      %v674 = vunpack.c.h.b16 %v298
      %v675 = vunpack.c.l.b16 %v299
      %v676 = vunpack.c.h.b16 %v299
      %v677 = vunpack.c.l.b16 %v300
      %v678 = vunpack.c.h.b16 %v300
      %v679 = vunpack.c.l.b16 %v301
      %v680 = vunpack.c.h.b16 %v301
      %v681 = vunpack.c.l.b16 %v302
      %v682 = vunpack.c.h.b16 %v302
      %v683 = vunpack.c.l.b16 %v303
      %v684 = vunpack.c.h.b16 %v303
      %v685 = vunpack.c.l.b16 %v304
      %v686 = vunpack.c.h.b16 %v304
      %v687 = vpack.c.b16 %v625, %v623
      %v688 = vpack.c.b16 %v626, %v624
      %v689 = vpack.c.b16 %v629, %v627
      %v690 = vpack.c.b16 %v630, %v628
      %v691 = vpack.c.b16 %v633, %v631
      %v692 = vpack.c.b16 %v634, %v632
      %v693 = vpack.c.b16 %v637, %v635
      %v694 = vpack.c.b16 %v638, %v636
      %v695 = vpack.c.b16 %v641, %v639
      %v696 = vpack.c.b16 %v642, %v640
      %v697 = vpack.c.b16 %v645, %v643
      %v698 = vpack.c.b16 %v646, %v644
      %v699 = vpack.c.b16 %v649, %v647
      %v700 = vpack.c.b16 %v650, %v648
      %v701 = vpack.c.b16 %v653, %v651
      %v702 = vpack.c.b16 %v654, %v652
      %v703 = vpack.c.b16 %v657, %v655
      %v704 = vpack.c.b16 %v658, %v656
      %v705 = vpack.c.b16 %v661, %v659
      %v706 = vpack.c.b16 %v662, %v660
      %v707 = vpack.c.b16 %v665, %v663
      %v708 = vpack.c.b16 %v666, %v664
      %v709 = vpack.c.b16 %v669, %v667
      %v710 = vpack.c.b16 %v670, %v668
      %v711 = vpack.c.b16 %v673, %v671
      %v712 = vpack.c.b16 %v674, %v672
      %v713 = vpack.c.b16 %v677, %v675
      %v714 = vpack.c.b16 %v678, %v676
      %v715 = vpack.c.b16 %v681, %v679
      %v716 = vpack.c.b16 %v682, %v680
      %v717 = vpack.c.b16 %v685, %v683
      %v718 = vpack.c.b16 %v686, %v684
      %751 = vmatpush.bf16.msra.mxu0 %v578
      %752 = vmatpush.bf16.msra.mxu0 %v577
      %753 = vmatpush.bf16.msra.mxu0 %v576
      %754 = vmatpush.bf16.msra.mxu0 %v575
      %755 = vmatpush.bf16.msra.mxu0 %v574
      %756 = vmatpush.bf16.msra.mxu0 %v573
      %757 = vmatpush.bf16.msra.mxu0 %v572
      %758 = vmatpush.bf16.msra.mxu0 %v571
      %759 = vmatmul.bf16.gmra.mxu0 %v687
      %v760 = vpop.f32.mrf.mxu0
      %v761 = vadd.f32 %v589, %v760
      %v762 = vpop.f32.mrf.mxu0
      %v763 = vadd.f32 %v589, %v762
      %764 = vmatmul.bf16.gmra.mxu0 %v689
      %v765 = vpop.f32.mrf.mxu0
      %v766 = vadd.f32 %v589, %v765
      %v767 = vpop.f32.mrf.mxu0
      %v768 = vadd.f32 %v589, %v767
      %769 = vmatmul.bf16.gmra.mxu0 %v691
      %v770 = vpop.f32.mrf.mxu0
      %v771 = vadd.f32 %v589, %v770
      %v772 = vpop.f32.mrf.mxu0
      %v773 = vadd.f32 %v589, %v772
      %774 = vmatmul.bf16.gmra.mxu0 %v693
      %v775 = vpop.f32.mrf.mxu0
      %v776 = vadd.f32 %v589, %v775
      %v777 = vpop.f32.mrf.mxu0
      %v778 = vadd.f32 %v589, %v777
      %779 = vmatmul.bf16.gmra.mxu0 %v695
      %v780 = vpop.f32.mrf.mxu0
      %v781 = vadd.f32 %v589, %v780
      %v782 = vpop.f32.mrf.mxu0
      %v783 = vadd.f32 %v589, %v782
      %784 = vmatmul.bf16.gmra.mxu0 %v697
      %v785 = vpop.f32.mrf.mxu0
      %v786 = vadd.f32 %v589, %v785
      %v787 = vpop.f32.mrf.mxu0
      %v788 = vadd.f32 %v589, %v787
      %789 = vmatmul.bf16.gmra.mxu0 %v699
      %v790 = vpop.f32.mrf.mxu0
      %v791 = vadd.f32 %v589, %v790
      %v792 = vpop.f32.mrf.mxu0
      %v793 = vadd.f32 %v589, %v792
      %794 = vmatmul.bf16.gmra.mxu0 %v701
      %v795 = vpop.f32.mrf.mxu0
      %v796 = vadd.f32 %v589, %v795
      %v797 = vpop.f32.mrf.mxu0
      %v798 = vadd.f32 %v589, %v797
      %799 = vmatmul.bf16.gmra.mxu0 %v703
      %v800 = vpop.f32.mrf.mxu0
      %v801 = vadd.f32 %v589, %v800
      %v802 = vpop.f32.mrf.mxu0
      %v803 = vadd.f32 %v589, %v802
      %804 = vmatmul.bf16.gmra.mxu0 %v705
      %v805 = vpop.f32.mrf.mxu0
      %v806 = vadd.f32 %v589, %v805
      %v807 = vpop.f32.mrf.mxu0
      %v808 = vadd.f32 %v589, %v807
      %809 = vmatmul.bf16.gmra.mxu0 %v707
      %v810 = vpop.f32.mrf.mxu0
      %v811 = vadd.f32 %v589, %v810
      %v812 = vpop.f32.mrf.mxu0
      %v813 = vadd.f32 %v589, %v812
      %814 = vmatmul.bf16.gmra.mxu0 %v709
      %v815 = vpop.f32.mrf.mxu0
      %v816 = vadd.f32 %v589, %v815
      %v817 = vpop.f32.mrf.mxu0
      %v818 = vadd.f32 %v589, %v817
      %819 = vmatmul.bf16.gmra.mxu0 %v711
      %v820 = vpop.f32.mrf.mxu0
      %v821 = vadd.f32 %v589, %v820
      %v822 = vpop.f32.mrf.mxu0
      %v823 = vadd.f32 %v589, %v822
      %824 = vmatmul.bf16.gmra.mxu0 %v713
      %v825 = vpop.f32.mrf.mxu0
      %v826 = vadd.f32 %v589, %v825
      %v827 = vpop.f32.mrf.mxu0
      %v828 = vadd.f32 %v589, %v827
      %829 = vmatmul.bf16.gmra.mxu0 %v715
      %v830 = vpop.f32.mrf.mxu0
      %v831 = vadd.f32 %v589, %v830
      %v832 = vpop.f32.mrf.mxu0
      %v833 = vadd.f32 %v589, %v832
      %834 = vmatmul.bf16.gmra.mxu0 %v717
      %v835 = vpop.f32.mrf.mxu0
      %v836 = vadd.f32 %v589, %v835
      %v837 = vpop.f32.mrf.mxu0
      %v838 = vadd.f32 %v589, %v837
      %839 = vdwg.mxu0
      %840 = vmatpush.bf16.msra.mxu0 %v586
      %841 = vmatpush.bf16.msra.mxu0 %v585
      %842 = vmatpush.bf16.msra.mxu0 %v584
      %843 = vmatpush.bf16.msra.mxu0 %v583
      %844 = vmatpush.bf16.msra.mxu0 %v582
      %845 = vmatpush.bf16.msra.mxu0 %v581
      %846 = vmatpush.bf16.msra.mxu0 %v580
      %847 = vmatpush.bf16.msra.mxu0 %v579
      %848 = vmatmul.bf16.gmra.mxu0 %v688
      %v849 = vpop.f32.mrf.mxu0
      %v850 = vadd.f32 %v761, %v849
      %v851 = vpop.f32.mrf.mxu0
      %v852 = vadd.f32 %v763, %v851
      %853 = vmatmul.bf16.gmra.mxu0 %v690
      %v854 = vpop.f32.mrf.mxu0
      %v855 = vadd.f32 %v766, %v854
      %v856 = vpop.f32.mrf.mxu0
      %v857 = vadd.f32 %v768, %v856
      %858 = vmatmul.bf16.gmra.mxu0 %v692
      %v859 = vpop.f32.mrf.mxu0
      %v860 = vadd.f32 %v771, %v859
      %v861 = vpop.f32.mrf.mxu0
      %v862 = vadd.f32 %v773, %v861
      %863 = vmatmul.bf16.gmra.mxu0 %v694
      %v864 = vpop.f32.mrf.mxu0
      %v865 = vadd.f32 %v776, %v864
      %v866 = vpop.f32.mrf.mxu0
      %v867 = vadd.f32 %v778, %v866
      %868 = vmatmul.bf16.gmra.mxu0 %v696
      %v869 = vpop.f32.mrf.mxu0
      %v870 = vadd.f32 %v781, %v869
      %v871 = vpop.f32.mrf.mxu0
      %v872 = vadd.f32 %v783, %v871
      %873 = vmatmul.bf16.gmra.mxu0 %v698
      %v874 = vpop.f32.mrf.mxu0
      %v875 = vadd.f32 %v786, %v874
      %v876 = vpop.f32.mrf.mxu0
      %v877 = vadd.f32 %v788, %v876
      %878 = vmatmul.bf16.gmra.mxu0 %v700
      %v879 = vpop.f32.mrf.mxu0
      %v880 = vadd.f32 %v791, %v879
      %v881 = vpop.f32.mrf.mxu0
      %v882 = vadd.f32 %v793, %v881
      %883 = vmatmul.bf16.gmra.mxu0 %v702
      %v884 = vpop.f32.mrf.mxu0
      %v885 = vadd.f32 %v796, %v884
      %v886 = vpop.f32.mrf.mxu0
      %v887 = vadd.f32 %v798, %v886
      %888 = vmatmul.bf16.gmra.mxu0 %v704
      %v889 = vpop.f32.mrf.mxu0
      %v890 = vadd.f32 %v801, %v889
      %v891 = vpop.f32.mrf.mxu0
      %v892 = vadd.f32 %v803, %v891
      %893 = vmatmul.bf16.gmra.mxu0 %v706
      %v894 = vpop.f32.mrf.mxu0
      %v895 = vadd.f32 %v806, %v894
      %v896 = vpop.f32.mrf.mxu0
      %v897 = vadd.f32 %v808, %v896
      %898 = vmatmul.bf16.gmra.mxu0 %v708
      %v899 = vpop.f32.mrf.mxu0
      %v900 = vadd.f32 %v811, %v899
      %v901 = vpop.f32.mrf.mxu0
      %v902 = vadd.f32 %v813, %v901
      %903 = vmatmul.bf16.gmra.mxu0 %v710
      %v904 = vpop.f32.mrf.mxu0
      %v905 = vadd.f32 %v816, %v904
      %v906 = vpop.f32.mrf.mxu0
      %v907 = vadd.f32 %v818, %v906
      %908 = vmatmul.bf16.gmra.mxu0 %v712
      %v909 = vpop.f32.mrf.mxu0
      %v910 = vadd.f32 %v821, %v909
      %v911 = vpop.f32.mrf.mxu0
      %v912 = vadd.f32 %v823, %v911
      %913 = vmatmul.bf16.gmra.mxu0 %v714
      %v914 = vpop.f32.mrf.mxu0
      %v915 = vadd.f32 %v826, %v914
      %v916 = vpop.f32.mrf.mxu0
      %v917 = vadd.f32 %v828, %v916
      %918 = vmatmul.bf16.gmra.mxu0 %v716
      %v919 = vpop.f32.mrf.mxu0
      %v920 = vadd.f32 %v831, %v919
      %v921 = vpop.f32.mrf.mxu0
      %v922 = vadd.f32 %v833, %v921
      %923 = vmatmul.bf16.gmra.mxu0 %v718
      %v924 = vpop.f32.mrf.mxu0
      %v925 = vadd.f32 %v836, %v924
      %v926 = vpop.f32.mrf.mxu0
      %v927 = vadd.f32 %v838, %v926
      %928 = vdwg.mxu0
      %vm929 = vcmp.gt.f32.partialorder %v850, 0.0
      %vm930 = vcmp.gt.f32.partialorder %v852, 0.0
      %vm931 = vcmp.gt.f32.partialorder %v855, 0.0
      %vm932 = vcmp.gt.f32.partialorder %v857, 0.0
      %vm933 = vcmp.gt.f32.partialorder %v860, 0.0
      %vm934 = vcmp.gt.f32.partialorder %v862, 0.0
      %vm935 = vcmp.gt.f32.partialorder %v865, 0.0
      %vm936 = vcmp.gt.f32.partialorder %v867, 0.0
      %vm937 = vcmp.gt.f32.partialorder %v870, 0.0
      %vm938 = vcmp.gt.f32.partialorder %v872, 0.0
      %vm939 = vcmp.gt.f32.partialorder %v875, 0.0
      %vm940 = vcmp.gt.f32.partialorder %v877, 0.0
      %vm941 = vcmp.gt.f32.partialorder %v880, 0.0
      %vm942 = vcmp.gt.f32.partialorder %v882, 0.0
      %vm943 = vcmp.gt.f32.partialorder %v885, 0.0
      %vm944 = vcmp.gt.f32.partialorder %v887, 0.0
      %vm945 = vcmp.gt.f32.partialorder %v890, 0.0
      %vm946 = vcmp.gt.f32.partialorder %v892, 0.0
      %vm947 = vcmp.gt.f32.partialorder %v895, 0.0
      %vm948 = vcmp.gt.f32.partialorder %v897, 0.0
      %vm949 = vcmp.gt.f32.partialorder %v900, 0.0
      %vm950 = vcmp.gt.f32.partialorder %v902, 0.0
      %vm951 = vcmp.gt.f32.partialorder %v905, 0.0
      %vm952 = vcmp.gt.f32.partialorder %v907, 0.0
      %vm953 = vcmp.gt.f32.partialorder %v910, 0.0
      %vm954 = vcmp.gt.f32.partialorder %v912, 0.0
      %vm955 = vcmp.gt.f32.partialorder %v915, 0.0
      %vm956 = vcmp.gt.f32.partialorder %v917, 0.0
      %vm957 = vcmp.gt.f32.partialorder %v920, 0.0
      %vm958 = vcmp.gt.f32.partialorder %v922, 0.0
      %vm959 = vcmp.gt.f32.partialorder %v925, 0.0
      %vm960 = vcmp.gt.f32.partialorder %v927, 0.0
      %v961 = vmul.f32 %v850, 0.2
      %v962 = vmul.f32 %v852, 0.2
      %v963 = vmul.f32 %v855, 0.2
      %v964 = vmul.f32 %v857, 0.2
      %v965 = vmul.f32 %v860, 0.2
      %v966 = vmul.f32 %v862, 0.2
      %v967 = vmul.f32 %v865, 0.2
      %v968 = vmul.f32 %v867, 0.2
      %v969 = vmul.f32 %v870, 0.2
      %v970 = vmul.f32 %v872, 0.2
      %v971 = vmul.f32 %v875, 0.2
      %v972 = vmul.f32 %v877, 0.2
      %v973 = vmul.f32 %v880, 0.2
      %v974 = vmul.f32 %v882, 0.2
      %v975 = vmul.f32 %v885, 0.2
      %v976 = vmul.f32 %v887, 0.2
      %v977 = vmul.f32 %v890, 0.2
      %v978 = vmul.f32 %v892, 0.2
      %v979 = vmul.f32 %v895, 0.2
      %v980 = vmul.f32 %v897, 0.2
      %v981 = vmul.f32 %v900, 0.2
      %v982 = vmul.f32 %v902, 0.2
      %v983 = vmul.f32 %v905, 0.2
      %v984 = vmul.f32 %v907, 0.2
      %v985 = vmul.f32 %v910, 0.2
      %v986 = vmul.f32 %v912, 0.2
      %v987 = vmul.f32 %v915, 0.2
      %v988 = vmul.f32 %v917, 0.2
      %v989 = vmul.f32 %v920, 0.2
      %v990 = vmul.f32 %v922, 0.2
      %v991 = vmul.f32 %v925, 0.2
      %v992 = vmul.f32 %v927, 0.2
      %v993 = vsel %vm929, %v850, %v961
      %v994 = vsel %vm930, %v852, %v962
      %v995 = vsel %vm931, %v855, %v963
      %v996 = vsel %vm932, %v857, %v964
      %v997 = vsel %vm933, %v860, %v965
      %v998 = vsel %vm934, %v862, %v966
      %v999 = vsel %vm935, %v865, %v967
      %v1000 = vsel %vm936, %v867, %v968
      %v1001 = vsel %vm937, %v870, %v969
      %v1002 = vsel %vm938, %v872, %v970
      %v1003 = vsel %vm939, %v875, %v971
      %v1004 = vsel %vm940, %v877, %v972
      %v1005 = vsel %vm941, %v880, %v973
      %v1006 = vsel %vm942, %v882, %v974
      %v1007 = vsel %vm943, %v885, %v975
      %v1008 = vsel %vm944, %v887, %v976
      %v1009 = vsel %vm945, %v890, %v977
      %v1010 = vsel %vm946, %v892, %v978
      %v1011 = vsel %vm947, %v895, %v979
      %v1012 = vsel %vm948, %v897, %v980
      %v1013 = vsel %vm949, %v900, %v981
      %v1014 = vsel %vm950, %v902, %v982
      %v1015 = vsel %vm951, %v905, %v983
      %v1016 = vsel %vm952, %v907, %v984
      %v1017 = vsel %vm953, %v910, %v985
      %v1018 = vsel %vm954, %v912, %v986
      %v1019 = vsel %vm955, %v915, %v987
      %v1020 = vsel %vm956, %v917, %v988
      %v1021 = vsel %vm957, %v920, %v989
      %v1022 = vsel %vm958, %v922, %v990
      %v1023 = vsel %vm959, %v925, %v991
      %v1024 = vsel %vm960, %v927, %v992
      %v1025 = vpack.c.bf16 %v994, %v993
      %v1026 = vpack.c.bf16 %v996, %v995
      %v1027 = vpack.c.bf16 %v998, %v997
      %v1028 = vpack.c.bf16 %v1000, %v999
      %v1029 = vpack.c.bf16 %v1002, %v1001
      %v1030 = vpack.c.bf16 %v1004, %v1003
      %v1031 = vpack.c.bf16 %v1006, %v1005
      %v1032 = vpack.c.bf16 %v1008, %v1007
      %v1033 = vpack.c.bf16 %v1010, %v1009
      %v1034 = vpack.c.bf16 %v1012, %v1011
      %v1035 = vpack.c.bf16 %v1014, %v1013
      %v1036 = vpack.c.bf16 %v1016, %v1015
      %v1037 = vpack.c.bf16 %v1018, %v1017
      %v1038 = vpack.c.bf16 %v1020, %v1019
      %v1039 = vpack.c.bf16 %v1022, %v1021
      %v1040 = vpack.c.bf16 %v1024, %v1023
      %1041 = vmatpush.bf16.msra.mxu0 %v1032
      %1042 = vmatpush.bf16.msra.mxu0 %v1031
      %1043 = vmatpush.bf16.msra.mxu0 %v1030
      %1044 = vmatpush.bf16.msra.mxu0 %v1029
      %1045 = vmatpush.bf16.msra.mxu0 %v1028
      %1046 = vmatpush.bf16.msra.mxu0 %v1027
      %1047 = vmatpush.bf16.msra.mxu0 %v1026
      %1048 = vmatpush.bf16.msra.mxu0 %v1025
      %1049 = vmatmul.bf16.gmra.mxu0 %v687
      %v1050 = vpop.f32.mrf.mxu0
      %v1051 = vadd.f32 0.0, %v1050
      %v1052 = vpop.f32.mrf.mxu0
      %v1053 = vadd.f32 0.0, %v1052
      %1054 = vmatmul.bf16.gmra.mxu0 %v689
      %v1055 = vpop.f32.mrf.mxu0
      %v1056 = vadd.f32 0.0, %v1055
      %v1057 = vpop.f32.mrf.mxu0
      %v1058 = vadd.f32 0.0, %v1057
      %1059 = vmatmul.bf16.gmra.mxu0 %v691
      %v1060 = vpop.f32.mrf.mxu0
      %v1061 = vadd.f32 0.0, %v1060
      %v1062 = vpop.f32.mrf.mxu0
      %v1063 = vadd.f32 0.0, %v1062
      %1064 = vmatmul.bf16.gmra.mxu0 %v693
      %v1065 = vpop.f32.mrf.mxu0
      %v1066 = vadd.f32 0.0, %v1065
      %v1067 = vpop.f32.mrf.mxu0
      %v1068 = vadd.f32 0.0, %v1067
      %1069 = vmatmul.bf16.gmra.mxu0 %v695
      %v1070 = vpop.f32.mrf.mxu0
      %v1071 = vadd.f32 0.0, %v1070
      %v1072 = vpop.f32.mrf.mxu0
      %v1073 = vadd.f32 0.0, %v1072
      %1074 = vmatmul.bf16.gmra.mxu0 %v697
      %v1075 = vpop.f32.mrf.mxu0
      %v1076 = vadd.f32 0.0, %v1075
      %v1077 = vpop.f32.mrf.mxu0
      %v1078 = vadd.f32 0.0, %v1077
      %1079 = vmatmul.bf16.gmra.mxu0 %v699
      %v1080 = vpop.f32.mrf.mxu0
      %v1081 = vadd.f32 0.0, %v1080
      %v1082 = vpop.f32.mrf.mxu0
      %v1083 = vadd.f32 0.0, %v1082
      %1084 = vmatmul.bf16.gmra.mxu0 %v701
      %v1085 = vpop.f32.mrf.mxu0
      %v1086 = vadd.f32 0.0, %v1085
      %v1087 = vpop.f32.mrf.mxu0
      %v1088 = vadd.f32 0.0, %v1087
      %1089 = vmatmul.bf16.gmra.mxu0 %v703
      %v1090 = vpop.f32.mrf.mxu0
      %v1091 = vadd.f32 0.0, %v1090
      %v1092 = vpop.f32.mrf.mxu0
      %v1093 = vadd.f32 0.0, %v1092
      %1094 = vmatmul.bf16.gmra.mxu0 %v705
      %v1095 = vpop.f32.mrf.mxu0
      %v1096 = vadd.f32 0.0, %v1095
      %v1097 = vpop.f32.mrf.mxu0
      %v1098 = vadd.f32 0.0, %v1097
      %1099 = vmatmul.bf16.gmra.mxu0 %v707
      %v1100 = vpop.f32.mrf.mxu0
      %v1101 = vadd.f32 0.0, %v1100
      %v1102 = vpop.f32.mrf.mxu0
      %v1103 = vadd.f32 0.0, %v1102
      %1104 = vmatmul.bf16.gmra.mxu0 %v709
      %v1105 = vpop.f32.mrf.mxu0
      %v1106 = vadd.f32 0.0, %v1105
      %v1107 = vpop.f32.mrf.mxu0
      %v1108 = vadd.f32 0.0, %v1107
      %1109 = vmatmul.bf16.gmra.mxu0 %v711
      %v1110 = vpop.f32.mrf.mxu0
      %v1111 = vadd.f32 0.0, %v1110
      %v1112 = vpop.f32.mrf.mxu0
      %v1113 = vadd.f32 0.0, %v1112
      %1114 = vmatmul.bf16.gmra.mxu0 %v713
      %v1115 = vpop.f32.mrf.mxu0
      %v1116 = vadd.f32 0.0, %v1115
      %v1117 = vpop.f32.mrf.mxu0
      %v1118 = vadd.f32 0.0, %v1117
      %1119 = vmatmul.bf16.gmra.mxu0 %v715
      %v1120 = vpop.f32.mrf.mxu0
      %v1121 = vadd.f32 0.0, %v1120
      %v1122 = vpop.f32.mrf.mxu0
      %v1123 = vadd.f32 0.0, %v1122
      %1124 = vmatmul.bf16.gmra.mxu0 %v717
      %v1125 = vpop.f32.mrf.mxu0
      %v1126 = vadd.f32 0.0, %v1125
      %v1127 = vpop.f32.mrf.mxu0
      %v1128 = vadd.f32 0.0, %v1127
      %1129 = vdwg.mxu0
      %1130 = vmatpush.bf16.msra.mxu0 %v1040
      %1131 = vmatpush.bf16.msra.mxu0 %v1039
      %1132 = vmatpush.bf16.msra.mxu0 %v1038
      %1133 = vmatpush.bf16.msra.mxu0 %v1037
      %1134 = vmatpush.bf16.msra.mxu0 %v1036
      %1135 = vmatpush.bf16.msra.mxu0 %v1035
      %1136 = vmatpush.bf16.msra.mxu0 %v1034
      %1137 = vmatpush.bf16.msra.mxu0 %v1033
      %1138 = vmatmul.bf16.gmra.mxu0 %v688
      %v1139 = vpop.f32.mrf.mxu0
      %v1140 = vadd.f32 %v1051, %v1139
      %v1141 = vpop.f32.mrf.mxu0
      %v1142 = vadd.f32 %v1053, %v1141
      %1143 = vmatmul.bf16.gmra.mxu0 %v690
      %v1144 = vpop.f32.mrf.mxu0
      %v1145 = vadd.f32 %v1056, %v1144
      %v1146 = vpop.f32.mrf.mxu0
      %v1147 = vadd.f32 %v1058, %v1146
      %1148 = vmatmul.bf16.gmra.mxu0 %v692
      %v1149 = vpop.f32.mrf.mxu0
      %v1150 = vadd.f32 %v1061, %v1149
      %v1151 = vpop.f32.mrf.mxu0
      %v1152 = vadd.f32 %v1063, %v1151
      %1153 = vmatmul.bf16.gmra.mxu0 %v694
      %v1154 = vpop.f32.mrf.mxu0
      %v1155 = vadd.f32 %v1066, %v1154
      %v1156 = vpop.f32.mrf.mxu0
      %v1157 = vadd.f32 %v1068, %v1156
      %1158 = vmatmul.bf16.gmra.mxu0 %v696
      %v1159 = vpop.f32.mrf.mxu0
      %v1160 = vadd.f32 %v1071, %v1159
      %v1161 = vpop.f32.mrf.mxu0
      %v1162 = vadd.f32 %v1073, %v1161
      %1163 = vmatmul.bf16.gmra.mxu0 %v698
      %v1164 = vpop.f32.mrf.mxu0
      %v1165 = vadd.f32 %v1076, %v1164
      %v1166 = vpop.f32.mrf.mxu0
      %v1167 = vadd.f32 %v1078, %v1166
      %1168 = vmatmul.bf16.gmra.mxu0 %v700
      %v1169 = vpop.f32.mrf.mxu0
      %v1170 = vadd.f32 %v1081, %v1169
      %v1171 = vpop.f32.mrf.mxu0
      %v1172 = vadd.f32 %v1083, %v1171
      %1173 = vmatmul.bf16.gmra.mxu0 %v702
      %v1174 = vpop.f32.mrf.mxu0
      %v1175 = vadd.f32 %v1086, %v1174
      %v1176 = vpop.f32.mrf.mxu0
      %v1177 = vadd.f32 %v1088, %v1176
      %1178 = vmatmul.bf16.gmra.mxu0 %v704
      %v1179 = vpop.f32.mrf.mxu0
      %v1180 = vadd.f32 %v1091, %v1179
      %v1181 = vpop.f32.mrf.mxu0
      %v1182 = vadd.f32 %v1093, %v1181
      %1183 = vmatmul.bf16.gmra.mxu0 %v706
      %v1184 = vpop.f32.mrf.mxu0
      %v1185 = vadd.f32 %v1096, %v1184
      %v1186 = vpop.f32.mrf.mxu0
      %v1187 = vadd.f32 %v1098, %v1186
      %1188 = vmatmul.bf16.gmra.mxu0 %v708
      %v1189 = vpop.f32.mrf.mxu0
      %v1190 = vadd.f32 %v1101, %v1189
      %v1191 = vpop.f32.mrf.mxu0
      %v1192 = vadd.f32 %v1103, %v1191
      %1193 = vmatmul.bf16.gmra.mxu0 %v710
      %v1194 = vpop.f32.mrf.mxu0
      %v1195 = vadd.f32 %v1106, %v1194
      %v1196 = vpop.f32.mrf.mxu0
      %v1197 = vadd.f32 %v1108, %v1196
      %1198 = vmatmul.bf16.gmra.mxu0 %v712
      %v1199 = vpop.f32.mrf.mxu0
      %v1200 = vadd.f32 %v1111, %v1199
      %v1201 = vpop.f32.mrf.mxu0
      %v1202 = vadd.f32 %v1113, %v1201
      %1203 = vmatmul.bf16.gmra.mxu0 %v714
      %v1204 = vpop.f32.mrf.mxu0
      %v1205 = vadd.f32 %v1116, %v1204
      %v1206 = vpop.f32.mrf.mxu0
      %v1207 = vadd.f32 %v1118, %v1206
      %1208 = vmatmul.bf16.gmra.mxu0 %v716
      %v1209 = vpop.f32.mrf.mxu0
      %v1210 = vadd.f32 %v1121, %v1209
      %v1211 = vpop.f32.mrf.mxu0
      %v1212 = vadd.f32 %v1123, %v1211
      %1213 = vmatmul.bf16.gmra.mxu0 %v718
      %v1214 = vpop.f32.mrf.mxu0
      %v1215 = vadd.f32 %v1126, %v1214
      %v1216 = vpop.f32.mrf.mxu0
      %v1217 = vadd.f32 %v1128, %v1216
      %1218 = vdwg.mxu0
      %v1219 = vld [vmem:[%s4] sm:$0xf]
      %v1220 = vld [vmem:[%s4 + $0x4] sm:$0xf]
      %v1221 = vpack.c.bf16 %v1142, %v1140
      %v1222 = vpack.c.bf16 %v1147, %v1145
      %v1223 = vpack.c.bf16 %v1152, %v1150
      %v1224 = vpack.c.bf16 %v1157, %v1155
      %v1225 = vpack.c.bf16 %v1162, %v1160
      %v1226 = vpack.c.bf16 %v1167, %v1165
      %v1227 = vpack.c.bf16 %v1172, %v1170
      %v1228 = vpack.c.bf16 %v1177, %v1175
      %v1229 = vpack.c.bf16 %v1182, %v1180
      %v1230 = vpack.c.bf16 %v1187, %v1185
      %v1231 = vpack.c.bf16 %v1192, %v1190
      %v1232 = vpack.c.bf16 %v1197, %v1195
      %v1233 = vpack.c.bf16 %v1202, %v1200
      %v1234 = vpack.c.bf16 %v1207, %v1205
      %v1235 = vpack.c.bf16 %v1212, %v1210
      %v1236 = vpack.c.bf16 %v1217, %v1215
      %v1237 = vld [vmem:[%s5] sm:$0x1]
      %v1239 = vperm.slane %v1237, 0
      %v1243 = vunpack.c.l.b16 %v1219
      %v1244 = vunpack.c.l.b16 %v1220
      %v1245 = vpack.c.b16 %v1244, %v1243
      %vm1247 = vcmask 130048
      %v1249 = vsel %vm1247, %v1221, 0
      %v1252 = vsel %vm1247, %v1222, 0
      %v1255 = vsel %vm1247, %v1223, 0
      %v1258 = vsel %vm1247, %v1224, 0
      %v1261 = vsel %vm1247, %v1225, 0
      %v1264 = vsel %vm1247, %v1226, 0
      %v1267 = vsel %vm1247, %v1227, 0
      %v1270 = vsel %vm1247, %v1228, 0
      %v1273 = vsel %vm1247, %v1229, 0
      %v1276 = vsel %vm1247, %v1230, 0
      %v1279 = vsel %vm1247, %v1231, 0
      %v1282 = vsel %vm1247, %v1232, 0
      %v1285 = vsel %vm1247, %v1233, 0
      %v1288 = vsel %vm1247, %v1234, 0
      %v1291 = vsel %vm1247, %v1235, 0
      %v1294 = vsel %vm1247, %v1236, 0
      %1296 = vmatpush.bf16.msra.mxu0 0
      %1297 = vmatpush.bf16.msra.mxu0 0
      %1298 = vmatpush.bf16.msra.mxu0 0
      %1299 = vmatpush.bf16.msra.mxu0 0
      %1300 = vmatpush.bf16.msra.mxu0 0
      %1301 = vmatpush.bf16.msra.mxu0 0
      %1302 = vmatpush.bf16.msra.mxu0 0
      %1303 = vmatpush.bf16.msra.mxu0 %v1245
      %1304 = vmatmul.bf16.gmra.mxu0 %v1249
      %v1305 = vpop.f32.mrf.mxu0
      %v1306 = vadd.f32 %v1239, %v1305
      %v1307 = vpop.f32.mrf.mxu0
      %v1308 = vadd.f32 %v1239, %v1307
      %1309 = vmatmul.bf16.gmra.mxu0 %v1252
      %v1310 = vpop.f32.mrf.mxu0
      %v1311 = vadd.f32 %v1239, %v1310
      %v1312 = vpop.f32.mrf.mxu0
      %v1313 = vadd.f32 %v1239, %v1312
      %1314 = vmatmul.bf16.gmra.mxu0 %v1255
      %v1315 = vpop.f32.mrf.mxu0
      %v1316 = vadd.f32 %v1239, %v1315
      %v1317 = vpop.f32.mrf.mxu0
      %v1318 = vadd.f32 %v1239, %v1317
      %1319 = vmatmul.bf16.gmra.mxu0 %v1258
      %v1320 = vpop.f32.mrf.mxu0
      %v1321 = vadd.f32 %v1239, %v1320
      %v1322 = vpop.f32.mrf.mxu0
      %v1323 = vadd.f32 %v1239, %v1322
      %1324 = vmatmul.bf16.gmra.mxu0 %v1261
      %v1325 = vpop.f32.mrf.mxu0
      %v1326 = vadd.f32 %v1239, %v1325
      %v1327 = vpop.f32.mrf.mxu0
      %v1328 = vadd.f32 %v1239, %v1327
      %1329 = vmatmul.bf16.gmra.mxu0 %v1264
      %v1330 = vpop.f32.mrf.mxu0
      %v1331 = vadd.f32 %v1239, %v1330
      %v1332 = vpop.f32.mrf.mxu0
      %v1333 = vadd.f32 %v1239, %v1332
      %1334 = vmatmul.bf16.gmra.mxu0 %v1267
      %v1335 = vpop.f32.mrf.mxu0
      %v1336 = vadd.f32 %v1239, %v1335
      %v1337 = vpop.f32.mrf.mxu0
      %v1338 = vadd.f32 %v1239, %v1337
      %1339 = vmatmul.bf16.gmra.mxu0 %v1270
      %v1340 = vpop.f32.mrf.mxu0
      %v1341 = vadd.f32 %v1239, %v1340
      %v1342 = vpop.f32.mrf.mxu0
      %v1343 = vadd.f32 %v1239, %v1342
      %1344 = vmatmul.bf16.gmra.mxu0 %v1273
      %v1345 = vpop.f32.mrf.mxu0
      %v1346 = vadd.f32 %v1239, %v1345
      %v1347 = vpop.f32.mrf.mxu0
      %v1348 = vadd.f32 %v1239, %v1347
      %1349 = vmatmul.bf16.gmra.mxu0 %v1276
      %v1350 = vpop.f32.mrf.mxu0
      %v1351 = vadd.f32 %v1239, %v1350
      %v1352 = vpop.f32.mrf.mxu0
      %v1353 = vadd.f32 %v1239, %v1352
      %1354 = vmatmul.bf16.gmra.mxu0 %v1279
      %v1355 = vpop.f32.mrf.mxu0
      %v1356 = vadd.f32 %v1239, %v1355
      %v1357 = vpop.f32.mrf.mxu0
      %v1358 = vadd.f32 %v1239, %v1357
      %1359 = vmatmul.bf16.gmra.mxu0 %v1282
      %v1360 = vpop.f32.mrf.mxu0
      %v1361 = vadd.f32 %v1239, %v1360
      %v1362 = vpop.f32.mrf.mxu0
      %v1363 = vadd.f32 %v1239, %v1362
      %1364 = vmatmul.bf16.gmra.mxu0 %v1285
      %v1365 = vpop.f32.mrf.mxu0
      %v1366 = vadd.f32 %v1239, %v1365
      %v1367 = vpop.f32.mrf.mxu0
      %v1368 = vadd.f32 %v1239, %v1367
      %1369 = vmatmul.bf16.gmra.mxu0 %v1288
      %v1370 = vpop.f32.mrf.mxu0
      %v1371 = vadd.f32 %v1239, %v1370
      %v1372 = vpop.f32.mrf.mxu0
      %v1373 = vadd.f32 %v1239, %v1372
      %1374 = vmatmul.bf16.gmra.mxu0 %v1291
      %v1375 = vpop.f32.mrf.mxu0
      %v1376 = vadd.f32 %v1239, %v1375
      %v1377 = vpop.f32.mrf.mxu0
      %v1378 = vadd.f32 %v1239, %v1377
      %1379 = vmatmul.bf16.gmra.mxu0 %v1294
      %v1380 = vpop.f32.mrf.mxu0
      %v1381 = vadd.f32 %v1239, %v1380
      %v1382 = vpop.f32.mrf.mxu0
      %v1383 = vadd.f32 %v1239, %v1382
      %1384 = vdwg.mxu0
      %v1385 = vlaneseq
      %v1386 = vand.u32 %v1385, 127
      %vm1387 = vcmp.ge.s32.totalorder %v1386, 3
      %vm1388 = vcmp.lt.s32.totalorder %v1386, 13
      %vm1389 = vmand %vm1387, %vm1388
      %v1390 = vsel %vm1389, %v1306, -1e+30
      %v1391 = vsel %vm1389, %v1308, -1e+30
      %v1392 = vsel %vm1389, %v1311, -1e+30
      %v1393 = vsel %vm1389, %v1313, -1e+30
      %v1394 = vsel %vm1389, %v1316, -1e+30
      %v1395 = vsel %vm1389, %v1318, -1e+30
      %v1396 = vsel %vm1389, %v1321, -1e+30
      %v1397 = vsel %vm1389, %v1323, -1e+30
      %v1398 = vsel %vm1389, %v1326, -1e+30
      %v1399 = vsel %vm1389, %v1328, -1e+30
      %v1400 = vsel %vm1389, %v1331, -1e+30
      %v1401 = vsel %vm1389, %v1333, -1e+30
      %v1402 = vsel %vm1389, %v1336, -1e+30
      %v1403 = vsel %vm1389, %v1338, -1e+30
      %v1404 = vsel %vm1389, %v1341, -1e+30
      %v1405 = vsel %vm1389, %v1343, -1e+30
      %v1406 = vsel %vm1389, %v1346, -1e+30
      %v1407 = vsel %vm1389, %v1348, -1e+30
      %v1408 = vsel %vm1389, %v1351, -1e+30
      %v1409 = vsel %vm1389, %v1353, -1e+30
      %v1410 = vsel %vm1389, %v1356, -1e+30
      %v1411 = vsel %vm1389, %v1358, -1e+30
      %v1412 = vsel %vm1389, %v1361, -1e+30
      %v1413 = vsel %vm1389, %v1363, -1e+30
      %v1414 = vsel %vm1389, %v1366, -1e+30
      %v1415 = vsel %vm1389, %v1368, -1e+30
      %v1416 = vsel %vm1389, %v1371, -1e+30
      %v1417 = vsel %vm1389, %v1373, -1e+30
      %v1418 = vsel %vm1389, %v1376, -1e+30
      %v1419 = vsel %vm1389, %v1378, -1e+30
      %v1420 = vsel %vm1389, %v1381, -1e+30
      %v1421 = vsel %vm1389, %v1383, -1e+30
      %1422 = vmax.xlane.f32.xlu0 %v1390
      %v1423 = vpop.xlane.xlu0 %1422
      %1424 = vmax.xlane.f32.xlu0 %v1391
      %v1425 = vpop.xlane.xlu0 %1424
      %1426 = vmax.xlane.f32.xlu0 %v1392
      %v1427 = vpop.xlane.xlu0 %1426
      %1428 = vmax.xlane.f32.xlu0 %v1393
      %v1429 = vpop.xlane.xlu0 %1428
      %1430 = vmax.xlane.f32.xlu0 %v1394
      %v1431 = vpop.xlane.xlu0 %1430
      %1432 = vmax.xlane.f32.xlu0 %v1395
      %v1433 = vpop.xlane.xlu0 %1432
      %1434 = vmax.xlane.f32.xlu0 %v1396
      %v1435 = vpop.xlane.xlu0 %1434
      %1436 = vmax.xlane.f32.xlu0 %v1397
      %v1437 = vpop.xlane.xlu0 %1436
      %1438 = vmax.xlane.f32.xlu0 %v1398
      %v1439 = vpop.xlane.xlu0 %1438
      %1440 = vmax.xlane.f32.xlu0 %v1399
      %v1441 = vpop.xlane.xlu0 %1440
      %1442 = vmax.xlane.f32.xlu0 %v1400
      %v1443 = vpop.xlane.xlu0 %1442
      %1444 = vmax.xlane.f32.xlu0 %v1401
      %v1445 = vpop.xlane.xlu0 %1444
      %1446 = vmax.xlane.f32.xlu0 %v1402
      %v1447 = vpop.xlane.xlu0 %1446
      %1448 = vmax.xlane.f32.xlu0 %v1403
      %v1449 = vpop.xlane.xlu0 %1448
      %1450 = vmax.xlane.f32.xlu0 %v1404
      %v1451 = vpop.xlane.xlu0 %1450
      %1452 = vmax.xlane.f32.xlu0 %v1405
      %v1453 = vpop.xlane.xlu0 %1452
      %1454 = vmax.xlane.f32.xlu0 %v1406
      %v1455 = vpop.xlane.xlu0 %1454
      %1456 = vmax.xlane.f32.xlu0 %v1407
      %v1457 = vpop.xlane.xlu0 %1456
      %1458 = vmax.xlane.f32.xlu0 %v1408
      %v1459 = vpop.xlane.xlu0 %1458
      %1460 = vmax.xlane.f32.xlu0 %v1409
      %v1461 = vpop.xlane.xlu0 %1460
      %1462 = vmax.xlane.f32.xlu0 %v1410
      %v1463 = vpop.xlane.xlu0 %1462
      %1464 = vmax.xlane.f32.xlu0 %v1411
      %v1465 = vpop.xlane.xlu0 %1464
      %1466 = vmax.xlane.f32.xlu0 %v1412
      %v1467 = vpop.xlane.xlu0 %1466
      %1468 = vmax.xlane.f32.xlu0 %v1413
      %v1469 = vpop.xlane.xlu0 %1468
      %1470 = vmax.xlane.f32.xlu0 %v1414
      %v1471 = vpop.xlane.xlu0 %1470
      %1472 = vmax.xlane.f32.xlu0 %v1415
      %v1473 = vpop.xlane.xlu0 %1472
      %1474 = vmax.xlane.f32.xlu0 %v1416
      %v1475 = vpop.xlane.xlu0 %1474
      %1476 = vmax.xlane.f32.xlu0 %v1417
      %v1477 = vpop.xlane.xlu0 %1476
      %1478 = vmax.xlane.f32.xlu0 %v1418
      %v1479 = vpop.xlane.xlu0 %1478
      %1480 = vmax.xlane.f32.xlu0 %v1419
      %v1481 = vpop.xlane.xlu0 %1480
      %1482 = vmax.xlane.f32.xlu0 %v1420
      %v1483 = vpop.xlane.xlu0 %1482
      %1484 = vmax.xlane.f32.xlu0 %v1421
      %v1485 = vpop.xlane.xlu0 %1484
      %v1486 = vsub.f32 %v1390, %v1423
      %v1487 = vsub.f32 %v1391, %v1425
      %v1488 = vsub.f32 %v1392, %v1427
      %v1489 = vsub.f32 %v1393, %v1429
      %v1490 = vsub.f32 %v1394, %v1431
      %v1491 = vsub.f32 %v1395, %v1433
      %v1492 = vsub.f32 %v1396, %v1435
      %v1493 = vsub.f32 %v1397, %v1437
      %v1494 = vsub.f32 %v1398, %v1439
      %v1495 = vsub.f32 %v1399, %v1441
      %v1496 = vsub.f32 %v1400, %v1443
      %v1497 = vsub.f32 %v1401, %v1445
      %v1498 = vsub.f32 %v1402, %v1447
      %v1499 = vsub.f32 %v1403, %v1449
      %v1500 = vsub.f32 %v1404, %v1451
      %v1501 = vsub.f32 %v1405, %v1453
      %v1502 = vsub.f32 %v1406, %v1455
      %v1503 = vsub.f32 %v1407, %v1457
      %v1504 = vsub.f32 %v1408, %v1459
      %v1505 = vsub.f32 %v1409, %v1461
      %v1506 = vsub.f32 %v1410, %v1463
      %v1507 = vsub.f32 %v1411, %v1465
      %v1508 = vsub.f32 %v1412, %v1467
      %v1509 = vsub.f32 %v1413, %v1469
      %v1510 = vsub.f32 %v1414, %v1471
      %v1511 = vsub.f32 %v1415, %v1473
      %v1512 = vsub.f32 %v1416, %v1475
      %v1513 = vsub.f32 %v1417, %v1477
      %v1514 = vsub.f32 %v1418, %v1479
      %v1515 = vsub.f32 %v1419, %v1481
      %v1516 = vsub.f32 %v1420, %v1483
      %v1517 = vsub.f32 %v1421, %v1485
      %v1518 = vmul.f32 %v1486, 1.442695
      %v1519 = vpow.pop %v1518
      %v1520 = vmul.f32 %v1487, 1.442695
      %v1521 = vpow.pop %v1520
      %v1522 = vmul.f32 %v1488, 1.442695
      %v1523 = vpow.pop %v1522
      %v1524 = vmul.f32 %v1489, 1.442695
      %v1525 = vpow.pop %v1524
      %v1526 = vmul.f32 %v1490, 1.442695
      %v1527 = vpow.pop %v1526
      %v1528 = vmul.f32 %v1491, 1.442695
      %v1529 = vpow.pop %v1528
      %v1530 = vmul.f32 %v1492, 1.442695
      %v1531 = vpow.pop %v1530
      %v1532 = vmul.f32 %v1493, 1.442695
      %v1533 = vpow.pop %v1532
      %v1534 = vmul.f32 %v1494, 1.442695
      %v1535 = vpow.pop %v1534
      %v1536 = vmul.f32 %v1495, 1.442695
      %v1537 = vpow.pop %v1536
      %v1538 = vmul.f32 %v1496, 1.442695
      %v1539 = vpow.pop %v1538
      %v1540 = vmul.f32 %v1497, 1.442695
      %v1541 = vpow.pop %v1540
      %v1542 = vmul.f32 %v1498, 1.442695
      %v1543 = vpow.pop %v1542
      %v1544 = vmul.f32 %v1499, 1.442695
      %v1545 = vpow.pop %v1544
      %v1546 = vmul.f32 %v1500, 1.442695
      %v1547 = vpow.pop %v1546
      %v1548 = vmul.f32 %v1501, 1.442695
      %v1549 = vpow.pop %v1548
      %v1550 = vmul.f32 %v1502, 1.442695
      %v1551 = vpow.pop %v1550
      %v1552 = vmul.f32 %v1503, 1.442695
      %v1553 = vpow.pop %v1552
      %v1554 = vmul.f32 %v1504, 1.442695
      %v1555 = vpow.pop %v1554
      %v1556 = vmul.f32 %v1505, 1.442695
      %v1557 = vpow.pop %v1556
      %v1558 = vmul.f32 %v1506, 1.442695
      %v1559 = vpow.pop %v1558
      %v1560 = vmul.f32 %v1507, 1.442695
      %v1561 = vpow.pop %v1560
      %v1562 = vmul.f32 %v1508, 1.442695
      %v1563 = vpow.pop %v1562
      %v1564 = vmul.f32 %v1509, 1.442695
      %v1565 = vpow.pop %v1564
      %v1566 = vmul.f32 %v1510, 1.442695
      %v1567 = vpow.pop %v1566
      %v1568 = vmul.f32 %v1511, 1.442695
      %v1569 = vpow.pop %v1568
      %v1570 = vmul.f32 %v1512, 1.442695
      %v1571 = vpow.pop %v1570
      %v1572 = vmul.f32 %v1513, 1.442695
      %v1573 = vpow.pop %v1572
      %v1574 = vmul.f32 %v1514, 1.442695
      %v1575 = vpow.pop %v1574
      %v1576 = vmul.f32 %v1515, 1.442695
      %v1577 = vpow.pop %v1576
      %v1578 = vmul.f32 %v1516, 1.442695
      %v1579 = vpow.pop %v1578
      %v1580 = vmul.f32 %v1517, 1.442695
      %v1581 = vpow.pop %v1580
      %v1582 = vsel %vm1389, %v1519, 0.0
      %v1583 = vsel %vm1389, %v1521, 0.0
      %v1584 = vsel %vm1389, %v1523, 0.0
      %v1585 = vsel %vm1389, %v1525, 0.0
      %v1586 = vsel %vm1389, %v1527, 0.0
      %v1587 = vsel %vm1389, %v1529, 0.0
      %v1588 = vsel %vm1389, %v1531, 0.0
      %v1589 = vsel %vm1389, %v1533, 0.0
      %v1590 = vsel %vm1389, %v1535, 0.0
      %v1591 = vsel %vm1389, %v1537, 0.0
      %v1592 = vsel %vm1389, %v1539, 0.0
      %v1593 = vsel %vm1389, %v1541, 0.0
      %v1594 = vsel %vm1389, %v1543, 0.0
      %v1595 = vsel %vm1389, %v1545, 0.0
      %v1596 = vsel %vm1389, %v1547, 0.0
      %v1597 = vsel %vm1389, %v1549, 0.0
      %v1598 = vsel %vm1389, %v1551, 0.0
      %v1599 = vsel %vm1389, %v1553, 0.0
      %v1600 = vsel %vm1389, %v1555, 0.0
      %v1601 = vsel %vm1389, %v1557, 0.0
      %v1602 = vsel %vm1389, %v1559, 0.0
      %v1603 = vsel %vm1389, %v1561, 0.0
      %v1604 = vsel %vm1389, %v1563, 0.0
      %v1605 = vsel %vm1389, %v1565, 0.0
      %v1606 = vsel %vm1389, %v1567, 0.0
      %v1607 = vsel %vm1389, %v1569, 0.0
      %v1608 = vsel %vm1389, %v1571, 0.0
      %v1609 = vsel %vm1389, %v1573, 0.0
      %v1610 = vsel %vm1389, %v1575, 0.0
      %v1611 = vsel %vm1389, %v1577, 0.0
      %v1612 = vsel %vm1389, %v1579, 0.0
      %v1613 = vsel %vm1389, %v1581, 0.0
      %1614 = vadd.xlane.f32.xlu0 %v1582
      %v1615 = vpop.xlane.xlu0 %1614
      %1616 = vadd.xlane.f32.xlu0 %v1583
      %v1617 = vpop.xlane.xlu0 %1616
      %1618 = vadd.xlane.f32.xlu0 %v1584
      %v1619 = vpop.xlane.xlu0 %1618
      %1620 = vadd.xlane.f32.xlu0 %v1585
      %v1621 = vpop.xlane.xlu0 %1620
      %1622 = vadd.xlane.f32.xlu0 %v1586
      %v1623 = vpop.xlane.xlu0 %1622
      %1624 = vadd.xlane.f32.xlu0 %v1587
      %v1625 = vpop.xlane.xlu0 %1624
      %1626 = vadd.xlane.f32.xlu0 %v1588
      %v1627 = vpop.xlane.xlu0 %1626
      %1628 = vadd.xlane.f32.xlu0 %v1589
      %v1629 = vpop.xlane.xlu0 %1628
      %1630 = vadd.xlane.f32.xlu0 %v1590
      %v1631 = vpop.xlane.xlu0 %1630
      %1632 = vadd.xlane.f32.xlu0 %v1591
      %v1633 = vpop.xlane.xlu0 %1632
      %1634 = vadd.xlane.f32.xlu0 %v1592
      %v1635 = vpop.xlane.xlu0 %1634
      %1636 = vadd.xlane.f32.xlu0 %v1593
      %v1637 = vpop.xlane.xlu0 %1636
      %1638 = vadd.xlane.f32.xlu0 %v1594
      %v1639 = vpop.xlane.xlu0 %1638
      %1640 = vadd.xlane.f32.xlu0 %v1595
      %v1641 = vpop.xlane.xlu0 %1640
      %1642 = vadd.xlane.f32.xlu0 %v1596
      %v1643 = vpop.xlane.xlu0 %1642
      %1644 = vadd.xlane.f32.xlu0 %v1597
      %v1645 = vpop.xlane.xlu0 %1644
      %1646 = vadd.xlane.f32.xlu0 %v1598
      %v1647 = vpop.xlane.xlu0 %1646
      %1648 = vadd.xlane.f32.xlu0 %v1599
      %v1649 = vpop.xlane.xlu0 %1648
      %1650 = vadd.xlane.f32.xlu0 %v1600
      %v1651 = vpop.xlane.xlu0 %1650
      %1652 = vadd.xlane.f32.xlu0 %v1601
      %v1653 = vpop.xlane.xlu0 %1652
      %1654 = vadd.xlane.f32.xlu0 %v1602
      %v1655 = vpop.xlane.xlu0 %1654
      %1656 = vadd.xlane.f32.xlu0 %v1603
      %v1657 = vpop.xlane.xlu0 %1656
      %1658 = vadd.xlane.f32.xlu0 %v1604
      %v1659 = vpop.xlane.xlu0 %1658
      %1660 = vadd.xlane.f32.xlu0 %v1605
      %v1661 = vpop.xlane.xlu0 %1660
      %1662 = vadd.xlane.f32.xlu0 %v1606
      %v1663 = vpop.xlane.xlu0 %1662
      %1664 = vadd.xlane.f32.xlu0 %v1607
      %v1665 = vpop.xlane.xlu0 %1664
      %1666 = vadd.xlane.f32.xlu0 %v1608
      %v1667 = vpop.xlane.xlu0 %1666
      %1668 = vadd.xlane.f32.xlu0 %v1609
      %v1669 = vpop.xlane.xlu0 %1668
      %1670 = vadd.xlane.f32.xlu0 %v1610
      %v1671 = vpop.xlane.xlu0 %1670
      %1672 = vadd.xlane.f32.xlu0 %v1611
      %v1673 = vpop.xlane.xlu0 %1672
      %1674 = vadd.xlane.f32.xlu0 %v1612
      %v1675 = vpop.xlane.xlu0 %1674
      %1676 = vadd.xlane.f32.xlu0 %v1613
      %v1677 = vpop.xlane.xlu0 %1676
      %v1678 = vlog2.pop %v1615
      %v1679 = vmul.f32 %v1678, 0.6931472
      %v1680 = vlog2.pop %v1617
      %v1681 = vmul.f32 %v1680, 0.6931472
      %v1682 = vlog2.pop %v1619
      %v1683 = vmul.f32 %v1682, 0.6931472
      %v1684 = vlog2.pop %v1621
      %v1685 = vmul.f32 %v1684, 0.6931472
      %v1686 = vlog2.pop %v1623
      %v1687 = vmul.f32 %v1686, 0.6931472
      %v1688 = vlog2.pop %v1625
      %v1689 = vmul.f32 %v1688, 0.6931472
      %v1690 = vlog2.pop %v1627
      %v1691 = vmul.f32 %v1690, 0.6931472
      %v1692 = vlog2.pop %v1629
      %v1693 = vmul.f32 %v1692, 0.6931472
      %v1694 = vlog2.pop %v1631
      %v1695 = vmul.f32 %v1694, 0.6931472
      %v1696 = vlog2.pop %v1633
      %v1697 = vmul.f32 %v1696, 0.6931472
      %v1698 = vlog2.pop %v1635
      %v1699 = vmul.f32 %v1698, 0.6931472
      %v1700 = vlog2.pop %v1637
      %v1701 = vmul.f32 %v1700, 0.6931472
      %v1702 = vlog2.pop %v1639
      %v1703 = vmul.f32 %v1702, 0.6931472
      %v1704 = vlog2.pop %v1641
      %v1705 = vmul.f32 %v1704, 0.6931472
      %v1706 = vlog2.pop %v1643
      %v1707 = vmul.f32 %v1706, 0.6931472
      %v1708 = vlog2.pop %v1645
      %v1709 = vmul.f32 %v1708, 0.6931472
      %v1710 = vlog2.pop %v1647
      %v1711 = vmul.f32 %v1710, 0.6931472
      %v1712 = vlog2.pop %v1649
      %v1713 = vmul.f32 %v1712, 0.6931472
      %v1714 = vlog2.pop %v1651
      %v1715 = vmul.f32 %v1714, 0.6931472
      %v1716 = vlog2.pop %v1653
      %v1717 = vmul.f32 %v1716, 0.6931472
      %v1718 = vlog2.pop %v1655
      %v1719 = vmul.f32 %v1718, 0.6931472
      %v1720 = vlog2.pop %v1657
      %v1721 = vmul.f32 %v1720, 0.6931472
      %v1722 = vlog2.pop %v1659
      %v1723 = vmul.f32 %v1722, 0.6931472
      %v1724 = vlog2.pop %v1661
      %v1725 = vmul.f32 %v1724, 0.6931472
      %v1726 = vlog2.pop %v1663
      %v1727 = vmul.f32 %v1726, 0.6931472
      %v1728 = vlog2.pop %v1665
      %v1729 = vmul.f32 %v1728, 0.6931472
      %v1730 = vlog2.pop %v1667
      %v1731 = vmul.f32 %v1730, 0.6931472
      %v1732 = vlog2.pop %v1669
      %v1733 = vmul.f32 %v1732, 0.6931472
      %v1734 = vlog2.pop %v1671
      %v1735 = vmul.f32 %v1734, 0.6931472
      %v1736 = vlog2.pop %v1673
      %v1737 = vmul.f32 %v1736, 0.6931472
      %v1738 = vlog2.pop %v1675
      %v1739 = vmul.f32 %v1738, 0.6931472
      %v1740 = vlog2.pop %v1677
      %v1741 = vmul.f32 %v1740, 0.6931472
      %v1742 = vsub.f32 %v1486, %v1679
      %v1743 = vsub.f32 %v1487, %v1681
      %v1744 = vsub.f32 %v1488, %v1683
      %v1745 = vsub.f32 %v1489, %v1685
      %v1746 = vsub.f32 %v1490, %v1687
      %v1747 = vsub.f32 %v1491, %v1689
      %v1748 = vsub.f32 %v1492, %v1691
      %v1749 = vsub.f32 %v1493, %v1693
      %v1750 = vsub.f32 %v1494, %v1695
      %v1751 = vsub.f32 %v1495, %v1697
      %v1752 = vsub.f32 %v1496, %v1699
      %v1753 = vsub.f32 %v1497, %v1701
      %v1754 = vsub.f32 %v1498, %v1703
      %v1755 = vsub.f32 %v1499, %v1705
      %v1756 = vsub.f32 %v1500, %v1707
      %v1757 = vsub.f32 %v1501, %v1709
      %v1758 = vsub.f32 %v1502, %v1711
      %v1759 = vsub.f32 %v1503, %v1713
      %v1760 = vsub.f32 %v1504, %v1715
      %v1761 = vsub.f32 %v1505, %v1717
      %v1762 = vsub.f32 %v1506, %v1719
      %v1763 = vsub.f32 %v1507, %v1721
      %v1764 = vsub.f32 %v1508, %v1723
      %v1765 = vsub.f32 %v1509, %v1725
      %v1766 = vsub.f32 %v1510, %v1727
      %v1767 = vsub.f32 %v1511, %v1729
      %v1768 = vsub.f32 %v1512, %v1731
      %v1769 = vsub.f32 %v1513, %v1733
      %v1770 = vsub.f32 %v1514, %v1735
      %v1771 = vsub.f32 %v1515, %v1737
      %v1772 = vsub.f32 %v1516, %v1739
      %v1773 = vsub.f32 %v1517, %v1741
      %v1774 = vsel %vm1389, %v1742, %v1306
      %v1775 = vsel %vm1389, %v1743, %v1308
      %v1776 = vsel %vm1389, %v1744, %v1311
      %v1777 = vsel %vm1389, %v1745, %v1313
      %v1778 = vsel %vm1389, %v1746, %v1316
      %v1779 = vsel %vm1389, %v1747, %v1318
      %v1780 = vsel %vm1389, %v1748, %v1321
      %v1781 = vsel %vm1389, %v1749, %v1323
      %v1782 = vsel %vm1389, %v1750, %v1326
      %v1783 = vsel %vm1389, %v1751, %v1328
      %v1784 = vsel %vm1389, %v1752, %v1331
      %v1785 = vsel %vm1389, %v1753, %v1333
      %v1786 = vsel %vm1389, %v1754, %v1336
      %v1787 = vsel %vm1389, %v1755, %v1338
      %v1788 = vsel %vm1389, %v1756, %v1341
      %v1789 = vsel %vm1389, %v1757, %v1343
      %v1790 = vsel %vm1389, %v1758, %v1346
      %v1791 = vsel %vm1389, %v1759, %v1348
      %v1792 = vsel %vm1389, %v1760, %v1351
      %v1793 = vsel %vm1389, %v1761, %v1353
      %v1794 = vsel %vm1389, %v1762, %v1356
      %v1795 = vsel %vm1389, %v1763, %v1358
      %v1796 = vsel %vm1389, %v1764, %v1361
      %v1797 = vsel %vm1389, %v1765, %v1363
      %v1798 = vsel %vm1389, %v1766, %v1366
      %v1799 = vsel %vm1389, %v1767, %v1368
      %v1800 = vsel %vm1389, %v1768, %v1371
      %v1801 = vsel %vm1389, %v1769, %v1373
      %v1802 = vsel %vm1389, %v1770, %v1376
      %v1803 = vsel %vm1389, %v1771, %v1378
      %v1804 = vsel %vm1389, %v1772, %v1381
      %v1805 = vsel %vm1389, %v1773, %v1383
      %1806 = vst [vmem:[%s271] sm:$0xff] %v1774
      %1807 = vst [vmem:[%s271 + $0x8] sm:$0xff] %v1775
      %1808 = vst [vmem:[%s271 + $0x10] sm:$0xff] %v1776
      %1809 = vst [vmem:[%s271 + $0x18] sm:$0xff] %v1777
      %1810 = vst [vmem:[%s271 + $0x20] sm:$0xff] %v1778
      %1811 = vst [vmem:[%s271 + $0x28] sm:$0xff] %v1779
      %1812 = vst [vmem:[%s271 + $0x30] sm:$0xff] %v1780
      %1813 = vst [vmem:[%s271 + $0x38] sm:$0xff] %v1781
      %1814 = vst [vmem:[%s271 + $0x40] sm:$0xff] %v1782
      %1815 = vst [vmem:[%s271 + $0x48] sm:$0xff] %v1783
      %1816 = vst [vmem:[%s271 + $0x50] sm:$0xff] %v1784
      %1817 = vst [vmem:[%s271 + $0x58] sm:$0xff] %v1785
      %1818 = vst [vmem:[%s271 + $0x60] sm:$0xff] %v1786
      %1819 = vst [vmem:[%s271 + $0x68] sm:$0xff] %v1787
      %1820 = vst [vmem:[%s271 + $0x70] sm:$0xff] %v1788
      %1821 = vst [vmem:[%s271 + $0x78] sm:$0xff] %v1789
      %1822 = vst [vmem:[%s271 + $0x80] sm:$0xff] %v1790
      %1823 = vst [vmem:[%s271 + $0x88] sm:$0xff] %v1791
      %1824 = vst [vmem:[%s271 + $0x90] sm:$0xff] %v1792
      %1825 = vst [vmem:[%s271 + $0x98] sm:$0xff] %v1793
      %1826 = vst [vmem:[%s271 + $0xa0] sm:$0xff] %v1794
      %1827 = vst [vmem:[%s271 + $0xa8] sm:$0xff] %v1795
      %1828 = vst [vmem:[%s271 + $0xb0] sm:$0xff] %v1796
      %1829 = vst [vmem:[%s271 + $0xb8] sm:$0xff] %v1797
      %1830 = vst [vmem:[%s271 + $0xc0] sm:$0xff] %v1798
      %1831 = vst [vmem:[%s271 + $0xc8] sm:$0xff] %v1799
      %1832 = vst [vmem:[%s271 + $0xd0] sm:$0xff] %v1800
      %1833 = vst [vmem:[%s271 + $0xd8] sm:$0xff] %v1801
      %1834 = vst [vmem:[%s271 + $0xe0] sm:$0xff] %v1802
      %1835 = vst [vmem:[%s271 + $0xe8] sm:$0xff] %v1803
      %1836 = vst [vmem:[%s271 + $0xf0] sm:$0xff] %v1804
      %1837 = vst [vmem:[%s271 + $0xf8] sm:$0xff] %v1805
      %p1838 = scmp.lt.s32.totalorder %s17, 3
      %s1839 = scalar_select %p1838, %s17, 3
      %s1840 = smul.addr %s1839, 32
      %s1841 = smul.addr %s1840, 8
      %s1842 = scalar_lea.vmem %s6, %s1841
      // Predicated region
      $region45: #{combined_gnn_forward.1} parent=43 // pred_check
        %p1843 = pneg %p171
      $region46: #{combined_gnn_forward.1} parent=43 // pred_check_branch
        %1845 = sbr.rel (%p1843) target = $region48
      $region47: #{combined_gnn_forward.1} parent=43 // pred_region
        _
      $region48: #{combined_gnn_forward.1} parent=43 // pred_fallthru
        _
    $region44: #{combined_gnn_forward.1} parent=5 // pred_fallthru
      _
    %p1846 = scmp.le.s32.totalorder 2, %s12
    // Predicated region
    $region49: #{combined_gnn_forward.1} parent=5 // pred_check
      %p1847 = pneg %p1846
    $region50: #{combined_gnn_forward.1} parent=5 // pred_check_branch
      %1849 = sbr.rel (%p1847) target = $region52
    $region51: #{combined_gnn_forward.1} parent=5 // pred_region
      %s1850 = ssub.s32 %s12, 2
      // Predicated region
      $region53: #{combined_gnn_forward.1} parent=51 // pred_check
        %p1851 = pneg %p177
      $region54: #{combined_gnn_forward.1} parent=51 // pred_check_branch
        %1853 = sbr.rel (%p1851) target = $region56
      $region55: #{combined_gnn_forward.1} parent=51 // pred_region
        %p1854 = scmp.lt.s32.totalorder %s18, 3
        %s1855 = scalar_select %p1854, %s18, 3
        %s1856 = smul.addr %s1855, 32
        %s1857 = smul.addr %s1856, 8
        %s1858 = scalar_lea.vmem %s6, %s1857
      $region56: #{combined_gnn_forward.1} parent=51 // pred_fallthru
        _
    $region52: #{combined_gnn_forward.1} parent=5 // pred_fallthru
      _
  $region6: #{combined_gnn_forward.1} parent=0 // loop_footer
    %s16 = sadd.s32 1, %s12
  $region7: #{combined_gnn_forward.1} parent=0 // loop_footer_branch
    %11 = sbr.rel target = $region3
  $region8: #{combined_gnn_forward.1} parent=0 // loop_exit
    _

</llo_original>
